<compile_context>
chip_gen: v7x
topology: tpu7x:2x2x1
jax: 0.10.0
libtpu: 0.0.40
codegen_flags: <defaults>
</compile_context>

<pallas_src>
import functools
import math

import jax
import jax.numpy as jnp
from jax.experimental import pallas as pl
from jax.experimental.pallas import tpu as pltpu


# ---------------------------------------------------------------------------
# math helpers (pure jnp: used both inside the kernel and in the reference)
# ---------------------------------------------------------------------------
def _layernorm(x, g, b, n_real=None, eps=1e-5):
    """Two-pass LayerNorm (torch semantics: biased var, eps inside rsqrt).

    `n_real` is the true feature count when the last dim carries zero padding
    (padded columns MUST be zero so the plain sum is unaffected); padded
    columns are masked out of the variance and produce zeros on output.
    """
    n_pad = x.shape[-1]
    n = n_pad if n_real is None else n_real
    mu = jnp.sum(x, axis=-1, keepdims=True) * (1.0 / n)
    xc = x - mu
    if n != n_pad:
        mask = jax.lax.broadcasted_iota(jnp.int32, x.shape, x.ndim - 1) < n
        xc = jnp.where(mask, xc, 0.0)
    var = jnp.sum(xc * xc, axis=-1, keepdims=True) * (1.0 / n)
    return xc * jax.lax.rsqrt(var + eps) * g + b


_SQRT_2_OVER_PI = math.sqrt(2.0 / math.pi)
_INV_SQRT_2 = 1.0 / math.sqrt(2.0)


def _gelu_tanh(x):
    # tanh approximation: routes through the EUP slot (otherwise idle here).
    return 0.5 * x * (1.0 + jnp.tanh(_SQRT_2_OVER_PI * (x + 0.044715 * x * x * x)))


def _gelu_exact(x):
    # nn.GELU() default = exact erf formulation (torch parity; VALU polynomial).
    return 0.5 * x * (1.0 + jax.lax.erf(x * _INV_SQRT_2))


def _round_up(x, m):
    return ((x + m - 1) // m) * m


# ---------------------------------------------------------------------------
# feature / hardware probes
# ---------------------------------------------------------------------------
@functools.lru_cache(maxsize=None)
def _weights_single_buffer_supported():
    """Probe whether pipeline_mode=pl.Buffered(1) works end-to-end.

    This tiny probe is the ONLY place failure is swallowed; the real kernel
    call is never wrapped in try/except, so genuine errors surface.
    """
    if not hasattr(pl, "Buffered"):
        return False
    try:
        wspec = pl.BlockSpec((8, 128), lambda i: (0, 0), pipeline_mode=pl.Buffered(1))
    except TypeError:
        return False

    def _probe_kernel(x_ref, w_ref, o_ref):
        o_ref[...] = x_ref[...] + w_ref[...]

    try:
        x = jnp.zeros((16, 128), jnp.float32)
        w = jnp.ones((8, 128), jnp.float32)
        out = pl.pallas_call(
            _probe_kernel,
            out_shape=jax.ShapeDtypeStruct((16, 128), jnp.float32),
            grid=(2,),
            in_specs=[pl.BlockSpec((8, 128), lambda i: (i, 0)), wspec],
            out_specs=pl.BlockSpec((8, 128), lambda i: (i, 0)),
        )(x, w)
        jax.block_until_ready(out)
        return True
    except Exception:  # capability probe only
        return False


def _vmem_capacity_bytes():
    try:
        return int(pltpu.get_tpu_info().vmem_capacity_bytes)
    except Exception:  # hardware query unavailable -> conservative v7x per-TC size
        return 64 * 1024 * 1024


# ---------------------------------------------------------------------------
# parameter preparation
# ---------------------------------------------------------------------------
_SMALL_ORDER = ("lnin_g", "lnin_b", "w_t1", "b_t1", "b_t2", "b_lr",
                "b1", "ln1_g", "ln1_b", "b2", "ln2_g", "ln2_b", "b3", "b_inv")
_MATMUL_WEIGHTS = ("w_lr", "w_t2", "w1_z", "w1_t", "w2", "w3", "w_inv")


def prepare_params(raw):
    """raw: f32 params in (in, out) layout with a single `w1` of shape
    (rank + 256, hidden).  Returns the kernel-ready structure:
      * param_dim padded to a multiple of 128 (lane-dense loads/stores),
      * all small per-channel vectors packed into one lane-aligned f32 row,
      * MXU weights cast to bf16 (kernel accumulates in f32),
      * w1 split into w1_z / w1_t so the in-kernel concat disappears.
    """
    P = int(raw["w_lr"].shape[0])
    rank = int(raw["w_lr"].shape[1])
    hidden = int(raw["w1"].shape[1])
    Ppad = _round_up(P, 128)
    pad = Ppad - P

    def pad_last(v):
        v = jnp.asarray(v, jnp.float32)
        if pad == 0:
            return v
        widths = [(0, 0)] * (v.ndim - 1) + [(0, pad)]
        return jnp.pad(v, widths)

    small_src = dict(raw)
    small_src["lnin_g"] = pad_last(raw["lnin_g"])   # pad gamma/beta with zeros so
    small_src["lnin_b"] = pad_last(raw["lnin_b"])   # padded LN outputs are zero
    small_src["b_inv"] = pad_last(raw["b_inv"])

    offsets, chunks, cur = {}, [], 0
    for name in _SMALL_ORDER:
        v = jnp.asarray(small_src[name], jnp.float32).reshape(1, -1)
        n = v.shape[1]
        n_pad = _round_up(n, 128)               # keep in-kernel slices lane-aligned
        if n_pad != n:
            v = jnp.pad(v, ((0, 0), (0, n_pad - n)))
        offsets[name] = (cur, n)
        chunks.append(v)
        cur += n_pad
    small = jnp.concatenate(chunks, axis=1)     # (1, TOTAL), TOTAL % 128 == 0

    w1 = jnp.asarray(raw["w1"], jnp.float32)
    w_lr = jnp.asarray(raw["w_lr"], jnp.float32)
    w_inv = jnp.asarray(raw["w_inv"], jnp.float32)
    if pad:
        w_lr = jnp.pad(w_lr, ((0, pad), (0, 0)))     # zero rows: padded z cols inert
        w_inv = jnp.pad(w_inv, ((0, 0), (0, pad)))   # zero cols: padded out cols = 0

    weights = {
        "w_lr": w_lr, "w_t2": raw["w_t2"],
        "w1_z": w1[:rank, :], "w1_t": w1[rank:, :],
        "w2": raw["w2"], "w3": raw["w3"], "w_inv": w_inv,
    }
    # TODO(synk): for very large param_dim, store w_lr/w_inv in fp8 (v7x) or int8
    # with per-channel scales (v5e/v6e), and tile the param_dim contraction so the
    # weights need not be fully VMEM-resident.
    weights = {k: jnp.asarray(v, jnp.bfloat16) for k, v in weights.items()}
    return {"small": small, "offsets": offsets,
            "param_dim": P, "param_dim_padded": Ppad,
            "rank": rank, "hidden": hidden, **weights}


# ---------------------------------------------------------------------------
# fused forward kernel
# ---------------------------------------------------------------------------
def _fm_forward_kernel(offs, n_real_p, use_tanh_gelu,
                       z_ref, t_ref, small_ref,
                       w_lr, w_t2, w1_z, w1_t, w2, w3, w_inv, out_ref):
    f32, bf16 = jnp.float32, jnp.bfloat16
    gelu = _gelu_tanh if use_tanh_gelu else _gelu_exact

    def p(name):                                   # (1, n) f32, static slice
        off, n = offs[name]
        return small_ref[:, off:off + n]

    z = z_ref[...]                                 # (tb, Ppad) f32, padded cols = 0
    t = t_ref[...]                                 # (tb, 1) f32

    # ----- input_norm + low_rank_proj -----
    z_norm = _layernorm(z, p("lnin_g"), p("lnin_b"), n_real=n_real_p)
    z_proj = jnp.dot(z_norm.astype(bf16), w_lr[...],
                     preferred_element_type=f32) + p("b_lr")            # (tb, R)

    # ----- time_embed: Linear(1,128) is an outer product -> VPU broadcast -----
    h_t = t * p("w_t1") + p("b_t1")                                      # (tb, 128)
    h_t = h_t * jax.nn.sigmoid(h_t)                                      # SiLU (EUP)
    t_emb = jnp.dot(h_t.astype(bf16), w_t2[...],
                    preferred_element_type=f32) + p("b_t2")              # (tb, 256)

    # ----- main_net layer 1: concat removed by splitting w1 -----
    h = (jnp.dot(z_proj.astype(bf16), w1_z[...], preferred_element_type=f32)
         + jnp.dot(t_emb.astype(bf16), w1_t[...], preferred_element_type=f32)
         + p("b1"))
    h = gelu(_layernorm(h, p("ln1_g"), p("ln1_b")))
    # TODO(synk): nn.Dropout is identity here (eval-time forward; no RNG mask).
    h = jnp.dot(h.astype(bf16), w2[...], preferred_element_type=f32) + p("b2")
    h = gelu(_layernorm(h, p("ln2_g"), p("ln2_b")))
    h = jnp.dot(h.astype(bf16), w3[...], preferred_element_type=f32) + p("b3")

    # ----- inv_proj -----
    out = jnp.dot(h.astype(bf16), w_inv[...], preferred_element_type=f32) + p("b_inv")
    out_ref[...] = out.astype(out_ref.dtype)


# ---------------------------------------------------------------------------
# tile / VMEM policy
# ---------------------------------------------------------------------------
def _pick_batch_tile(B, Ppad, hidden, weight_bytes, small_bytes, single_buf, budget):
    """Prefer one grid step covering the whole batch; shrink only for VMEM."""
    wmul = 1 if single_buf else 2
    fixed = wmul * (weight_bytes + small_bytes)

    def need(tb):
        io = 2 * tb * Ppad * 4 * 2                       # z in + out, f32, double-buffered
        t_io = 2 * tb * 128 * 4                          # t tile (lane-padded), double-buffered
        work = 6 * tb * max(Ppad, hidden, 512) * 4       # f32 intermediates headroom
        return fixed + io + t_io + work + (2 << 20)

    tb = 8 if B <= 8 else min(512, _round_up(B, 16))     # mult of 16 (bf16 sublanes)
    while tb > 16 and need(tb) > budget:
        tb = max(16, _round_up(tb // 2, 16))
    return tb, need(tb)


# ---------------------------------------------------------------------------
# wrapper
# ---------------------------------------------------------------------------
def flow_matching_forward(z, t, prepared, *, use_tanh_gelu=True):
    """z: (B, param_dim) f32; t: scalar / (B,) / (1,) / (B,1) / (1,1).
    Returns (B, param_dim) f32.  use_tanh_gelu=False restores exact-erf GELU."""
    z = jnp.asarray(z, jnp.float32)
    if z.ndim == 1:
        z = z[None, :]
    B, P = z.shape
    assert P == prepared["param_dim"], (P, prepared["param_dim"])
    Ppad = prepared["param_dim_padded"]

    # --- torch-style t normalization (host glue) ---
    t = jnp.asarray(t, jnp.float32)
    if t.ndim == 0:
        t = jnp.broadcast_to(t.reshape(1, 1), (B, 1))
    elif t.ndim == 1:
        if t.shape[0] == B:
            t = t.reshape(B, 1)
        elif t.shape[0] == 1:
            t = jnp.broadcast_to(t.reshape(1, 1), (B, 1))
        else:
            raise ValueError(f"Unexpected shape for t: {t.shape}, expected ({B}, 1)")
    elif t.ndim == 2 and t.shape == (1, 1):
        t = jnp.broadcast_to(t, (B, 1))
    elif t.ndim != 2 or t.shape != (B, 1):
        raise ValueError(f"Unexpected shape for t: {t.shape}, expected ({B}, 1)")

    small = prepared["small"]
    offs = prepared["offsets"]
    weights = [prepared[k] for k in _MATMUL_WEIGHTS]
    weight_bytes = sum(int(w.size) * w.dtype.itemsize for w in weights)
    small_bytes = int(small.size) * 4

    single_buf = _weights_single_buffer_supported()
    vmem_cap = _vmem_capacity_bytes()
    budget = max(vmem_cap - (8 << 20), 16 << 20)

    tb, need = _pick_batch_tile(B, Ppad, prepared["hidden"],
                                weight_bytes, small_bytes, single_buf, budget)
    Bp = _round_up(B, tb)
    if Bp != B or Ppad != P:
        z = jnp.pad(z, ((0, Bp - B), (0, Ppad - P)))
        t = jnp.pad(t, ((0, Bp - B), (0, 0)))
    grid = (Bp // tb,)

    kernel = functools.partial(_fm_forward_kernel, offs, P, use_tanh_gelu)

    def invariant_spec(shape):
        idx = lambda i, _nd=len(shape): (0,) * _nd
        if single_buf:
            # grid-invariant operands: don't waste VMEM double-buffering them.
            return pl.BlockSpec(shape, idx, pipeline_mode=pl.Buffered(1))
        return pl.BlockSpec(shape, idx)

    in_specs = [
        pl.BlockSpec((tb, Ppad), lambda i: (i, 0)),   # z: pipelined over batch
        pl.BlockSpec((tb, 1), lambda i: (i, 0)),      # t
        invariant_spec(tuple(small.shape)),           # packed biases / LN params
    ] + [invariant_spec(tuple(w.shape)) for w in weights]
    out_spec = pl.BlockSpec((tb, Ppad), lambda i: (i, 0))

    R, H = prepared["rank"], prepared["hidden"]
    flops = 2 * Bp * (Ppad * R + 128 + 128 * 256 + R * H + 256 * H + H * H + H * R + R * Ppad)
    transcendentals = Bp * (128 + 2 * H)              # sigmoid + 2x GELU tanh
    bytes_accessed = 2 * Bp * Ppad * 4 + Bp * 4 + weight_bytes + small_bytes

    vmem_limit = int(min(budget, max(need + (4 << 20), 32 << 20)))

    out = pl.pallas_call(
        kernel,
        out_shape=jax.ShapeDtypeStruct((Bp, Ppad), jnp.float32),
        grid=grid,
        in_specs=in_specs,
        out_specs=out_spec,
        compiler_params=pltpu.CompilerParams(
            dimension_semantics=("parallel",),
            vmem_limit_bytes=vmem_limit,
        ),
        cost_estimate=pl.CostEstimate(
            flops=int(flops),
            transcendentals=int(transcendentals),
            bytes_accessed=int(bytes_accessed),
        ),
    )(z, t, small, *weights)

    return out[:B, :P]


# ---------------------------------------------------------------------------
# deterministic parameter init (xavier_normal_, gain=0.02; biases 0; LN 1/0)
# ---------------------------------------------------------------------------
def init_params(key, param_dim, hidden_dim, rank):
    def xavier(k, fan_in, fan_out, gain=0.02):
        std = gain * math.sqrt(2.0 / (fan_in + fan_out))
        return std * jax.random.normal(k, (fan_in, fan_out), jnp.float32)

    ks = jax.random.split(key, 7)
    p = {}
    p["lnin_g"] = jnp.ones((1, param_dim), jnp.float32)
    p["lnin_b"] = jnp.zeros((1, param_dim), jnp.float32)
    p["w_lr"] = xavier(ks[0], param_dim, rank)
    p["b_lr"] = jnp.zeros((1, rank), jnp.float32)
    p["w_t1"] = xavier(ks[1], 1, 128)
    p["b_t1"] = jnp.zeros((1, 128), jnp.float32)
    p["w_t2"] = xavier(ks[2], 128, 256)
    p["b_t2"] = jnp.zeros((1, 256), jnp.float32)
    p["w1"] = xavier(ks[3], rank + 256, hidden_dim)
    p["b1"] = jnp.zeros((1, hidden_dim), jnp.float32)
    p["ln1_g"] = jnp.ones((1, hidden_dim), jnp.float32)
    p["ln1_b"] = jnp.zeros((1, hidden_dim), jnp.float32)
    p["w2"] = xavier(ks[4], hidden_dim, hidden_dim)
    p["b2"] = jnp.zeros((1, hidden_dim), jnp.float32)
    p["ln2_g"] = jnp.ones((1, hidden_dim), jnp.float32)
    p["ln2_b"] = jnp.zeros((1, hidden_dim), jnp.float32)
    p["w3"] = xavier(ks[5], hidden_dim, rank)
    p["b3"] = jnp.zeros((1, rank), jnp.float32)
    p["w_inv"] = xavier(ks[6], rank, param_dim)
    p["b_inv"] = jnp.zeros((1, param_dim), jnp.float32)
    return p


# ---------------------------------------------------------------------------
# pure-JAX references
#   * default (f32 weights, exact-erf GELU) = true torch forward semantics
#   * (bf16, tanh) = numerics-matched to the kernel, to isolate real bugs
# ---------------------------------------------------------------------------
def reference_forward(z, t, raw, *, weights_dtype=jnp.float32, use_tanh_gelu=False):
    f32 = jnp.float32
    gelu = _gelu_tanh if use_tanh_gelu else _gelu_exact

    def mm(a, w):
        return jnp.dot(a.astype(weights_dtype), jnp.asarray(w, weights_dtype),
                       preferred_element_type=f32)

    z_norm = _layernorm(z, raw["lnin_g"], raw["lnin_b"])
    z_proj = mm(z_norm, raw["w_lr"]) + raw["b_lr"]
    h_t = t * raw["w_t1"] + raw["b_t1"]
    h_t = h_t * jax.nn.sigmoid(h_t)
    t_emb = mm(h_t, raw["w_t2"]) + raw["b_t2"]
    x = jnp.concatenate([z_proj, t_emb], axis=-1)
    h = mm(x, raw["w1"]) + raw["b1"]
    h = gelu(_layernorm(h, raw["ln1_g"], raw["ln1_b"]))
    h = mm(h, raw["w2"]) + raw["b2"]
    h = gelu(_layernorm(h, raw["ln2_g"], raw["ln2_b"]))
    h = mm(h, raw["w3"]) + raw["b3"]
    return mm(h, raw["w_inv"]) + raw["b_inv"]


if __name__ == "__main__":
    # PARAM_DIM deliberately NOT a multiple of 128 to exercise the host-side
    # lane padding + masked LayerNorm path; shapes kept small.
    PARAM_DIM, HIDDEN_DIM, RANK = 448, 256, 128

    key = jax.random.PRNGKey(0)
    k_p, k_z = jax.random.split(key)
    raw = init_params(k_p, PARAM_DIM, HIDDEN_DIM, RANK)
    prepared = prepare_params(raw)

    def check(batch):
        kz, kt = jax.random.split(jax.random.fold_in(k_z, batch))
        z = jax.random.normal(kz, (batch, PARAM_DIM), jnp.float32)
        t = jax.random.uniform(kt, (batch,), jnp.float32)   # 1-D t, wrapper reshapes

        out = jax.block_until_ready(flow_matching_forward(z, t, prepared))
        assert out.shape == (batch, PARAM_DIM)

        t2 = t.reshape(-1, 1)
        ref_torch = reference_forward(z, t2, raw)                      # f32 + erf (torch)
        ref_match = reference_forward(z, t2, raw,
                                      weights_dtype=jnp.bfloat16,
                                      use_tanh_gelu=True)              # kernel numerics
        denom = float(jnp.max(jnp.abs(ref_torch))) + 1e-12
        err_match = float(jnp.max(jnp.abs(out - ref_match))) / denom
        err_torch = float(jnp.max(jnp.abs(out - ref_torch))) / denom
        assert err_match < 5e-3, ("kernel vs matched reference", err_match)
        # documented tolerance of bf16 weights + tanh-GELU vs torch f32/erf forward
        assert err_torch < 5e-2, ("kernel vs torch-parity reference", err_torch)

    check(24)    # single grid step: padded rows + padded param_dim columns
    check(530)   # multiple grid steps: batch pipelining / megacore "parallel" path
    print("KERNEL_OK")
</pallas_src>

<mosaic_0001>
module attributes {stable_mosaic.version = 11 : i64} {
  func.func @_probe_kernel(%arg0: i32, %arg1: memref<8x128xf32, #tpu.memory_space<vmem>>, %arg2: memref<8x128xf32, #tpu.memory_space<vmem>>, %arg3: memref<8x128xf32, #tpu.memory_space<vmem>>) attributes {dimension_semantics = [#tpu.dimension_semantics<arbitrary>], iteration_bounds = array<i64: 2>, scalar_prefetch = 0 : i64, scratch_operands = 0 : i64, tpu.core_type = #tpu.core_type<tc>, window_params = [{transform_indices = @transform_0, window_bounds = array<i64: 8, 128>}, {pipeline_mode = #tpu.pipeline_mode<synchronous>, transform_indices = @transform_1, window_bounds = array<i64: 8, 128>}, {transform_indices = @transform_2, window_bounds = array<i64: 8, 128>}]} {
    %c0 = arith.constant 0 : index
    %c0_0 = arith.constant 0 : index
    %0 = vector.load %arg1[%c0, %c0_0] : memref<8x128xf32, #tpu.memory_space<vmem>>, vector<8x128xf32>
    %c0_1 = arith.constant 0 : index
    %c0_2 = arith.constant 0 : index
    %1 = vector.load %arg2[%c0_1, %c0_2] : memref<8x128xf32, #tpu.memory_space<vmem>>, vector<8x128xf32>
    %2 = arith.addf %0, %1 : vector<8x128xf32>
    %c0_3 = arith.constant 0 : index
    %c0_4 = arith.constant 0 : index
    %3 = vector.load %arg3[%c0_3, %c0_4] : memref<8x128xf32, #tpu.memory_space<vmem>>, vector<8x128xf32>
    tpu.vector_store %arg3[%c0_3, %c0_4], %2 {strides = array<i32>} : memref<8x128xf32, #tpu.memory_space<vmem>>, vector<8x128xf32>,
    return
  }
  func.func @transform_0(%arg0: i32) -> (i32, i32) {
    %c0_i32 = arith.constant 0 : i32
    %c0_i32_0 = arith.constant 0 : i32
    return %arg0, %c0_i32 : i32, i32
  }
  func.func @transform_1(%arg0: i32) -> (i32, i32) {
    %c0_i32 = arith.constant 0 : i32
    %c0_i32_0 = arith.constant 0 : i32
    %c0_i32_1 = arith.constant 0 : i32
    return %c0_i32, %c0_i32_0 : i32, i32
  }
  func.func @transform_2(%arg0: i32) -> (i32, i32) {
    %c0_i32 = arith.constant 0 : i32
    %c0_i32_0 = arith.constant 0 : i32
    return %arg0, %c0_i32 : i32, i32
  }
}

module attributes {stable_mosaic.version = 11 : i64} {
  func.func @_fm_forward_kernel(%arg0: i32, %arg1: memref<32x512xf32, #tpu.memory_space<vmem>>, %arg2: memref<32x1xf32, #tpu.memory_space<vmem>>, %arg3: memref<1x3840xf32, #tpu.memory_space<vmem>>, %arg4: memref<512x128xbf16, #tpu.memory_space<vmem>>, %arg5: memref<128x256xbf16, #tpu.memory_space<vmem>>, %arg6: memref<128x256xbf16, #tpu.memory_space<vmem>>, %arg7: memref<256x256xbf16, #tpu.memory_space<vmem>>, %arg8: memref<256x256xbf16, #tpu.memory_space<vmem>>, %arg9: memref<256x128xbf16, #tpu.memory_space<vmem>>, %arg10: memref<128x512xbf16, #tpu.memory_space<vmem>>, %arg11: memref<32x512xf32, #tpu.memory_space<vmem>>) attributes {dimension_semantics = [#tpu.dimension_semantics<parallel>], iteration_bounds = array<i64: 1>, scalar_prefetch = 0 : i64, scratch_operands = 0 : i64, tpu.core_type = #tpu.core_type<tc>, window_params = [{transform_indices = @transform_0, window_bounds = array<i64: 32, 512>}, {transform_indices = @transform_1, window_bounds = array<i64: 32, 1>}, {pipeline_mode = #tpu.pipeline_mode<synchronous>, transform_indices = @transform_2, window_bounds = array<i64: 1, 3840>}, {pipeline_mode = #tpu.pipeline_mode<synchronous>, transform_indices = @transform_3, window_bounds = array<i64: 512, 128>}, {pipeline_mode = #tpu.pipeline_mode<synchronous>, transform_indices = @transform_4, window_bounds = array<i64: 128, 256>}, {pipeline_mode = #tpu.pipeline_mode<synchronous>, transform_indices = @transform_5, window_bounds = array<i64: 128, 256>}, {pipeline_mode = #tpu.pipeline_mode<synchronous>, transform_indices = @transform_6, window_bounds = array<i64: 256, 256>}, {pipeline_mode = #tpu.pipeline_mode<synchronous>, transform_indices = @transform_7, window_bounds = array<i64: 256, 256>}, {pipeline_mode = #tpu.pipeline_mode<synchronous>, transform_indices = @transform_8, window_bounds = array<i64: 256, 128>}, {pipeline_mode = #tpu.pipeline_mode<synchronous>, transform_indices = @transform_9, window_bounds = array<i64: 128, 512>}, {transform_indices = @transform_10, window_bounds = array<i64: 32, 512>}]} {
    %c0 = arith.constant 0 : index
    %c0_0 = arith.constant 0 : index
    %0 = vector.load %arg1[%c0, %c0_0] : memref<32x512xf32, #tpu.memory_space<vmem>>, vector<32x512xf32>
    %c0_1 = arith.constant 0 : index
    %c0_2 = arith.constant 0 : index
    %1 = vector.load %arg2[%c0_1, %c0_2] : memref<32x1xf32, #tpu.memory_space<vmem>>, vector<32x1xf32>
    %c0_3 = arith.constant 0 : index
    %c0_4 = arith.constant 0 : index
    %2 = vector.load %arg3[%c0_3, %c0_4] : memref<1x3840xf32, #tpu.memory_space<vmem>>, vector<1x512xf32>
    %c0_5 = arith.constant 0 : index
    %c512 = arith.constant 512 : index
    %3 = vector.load %arg3[%c0_5, %c512] : memref<1x3840xf32, #tpu.memory_space<vmem>>, vector<1x512xf32>
    %cst = arith.constant dense<0.000000e+00> : vector<32xf32>
    %4 = vector.multi_reduction <add>, %0, %cst [1] : vector<32x512xf32> to vector<32xf32>
    %5 = vector.shape_cast %4 : vector<32xf32> to vector<32x1xf32>
    %cst_6 = arith.constant 0.00223214296 : f32
    %6 = vector.broadcast %cst_6 : f32 to vector<32x1xf32>
    %7 = arith.mulf %5, %6 : vector<32x1xf32>
    %8 = vector.broadcast %7 : vector<32x1xf32> to vector<32x512xf32>
    %9 = arith.subf %0, %8 : vector<32x512xf32>
    %10 = tpu.iota {dimensions = array<i32: 1>} : vector<32x512xi32>
    %c448_i32 = arith.constant 448 : i32
    %11 = vector.broadcast %c448_i32 : i32 to vector<32x512xi32>
    %12 = arith.cmpi slt, %10, %11 : vector<32x512xi32>
    %cst_7 = arith.constant 0.000000e+00 : f32
    %13 = vector.broadcast %cst_7 : f32 to vector<32x512xf32>
    %14 = arith.select %12, %9, %13 : vector<32x512xi1>, vector<32x512xf32>
    %15 = arith.mulf %14, %14 : vector<32x512xf32>
    %cst_8 = arith.constant dense<0.000000e+00> : vector<32xf32>
    %16 = vector.multi_reduction <add>, %15, %cst_8 [1] : vector<32x512xf32> to vector<32xf32>
    %17 = vector.shape_cast %16 : vector<32xf32> to vector<32x1xf32>
    %cst_9 = arith.constant 0.00223214296 : f32
    %18 = vector.broadcast %cst_9 : f32 to vector<32x1xf32>
    %19 = arith.mulf %17, %18 : vector<32x1xf32>
    %cst_10 = arith.constant 9.99999974E-6 : f32
    %20 = vector.broadcast %cst_10 : f32 to vector<32x1xf32>
    %21 = arith.addf %19, %20 : vector<32x1xf32>
    %22 = math.rsqrt %21 : vector<32x1xf32>
    %23 = vector.broadcast %22 : vector<32x1xf32> to vector<32x512xf32>
    %24 = arith.mulf %14, %23 : vector<32x512xf32>
    %25 = vector.broadcast %2 : vector<1x512xf32> to vector<32x512xf32>
    %26 = arith.mulf %24, %25 : vector<32x512xf32>
    %27 = vector.broadcast %3 : vector<1x512xf32> to vector<32x512xf32>
    %28 = arith.addf %26, %27 : vector<32x512xf32>
    %29 = arith.truncf %28 : vector<32x512xf32> to vector<32x512xbf16>
    %c0_11 = arith.constant 0 : index
    %c0_12 = arith.constant 0 : index
    %30 = vector.load %arg4[%c0_11, %c0_12] : memref<512x128xbf16, #tpu.memory_space<vmem>>, vector<512x128xbf16>
    %cst_13 = arith.constant dense<0.000000e+00> : vector<32x128xf32>
    %31 = tpu.matmul %29, %30, %cst_13 {dimension_numbers = #tpu.dot_dimension_numbers<[1], [0], [0], [1], [0, 0, 1, 1], [], []>} : vector<32x512xbf16>, vector<512x128xbf16>, vector<32x128xf32> -> vector<32x128xf32>
    %c0_14 = arith.constant 0 : index
    %c1536 = arith.constant 1536 : index
    %32 = vector.load %arg3[%c0_14, %c1536] : memref<1x3840xf32, #tpu.memory_space<vmem>>, vector<1x128xf32>
    %33 = vector.broadcast %32 : vector<1x128xf32> to vector<32x128xf32>
    %34 = arith.addf %31, %33 : vector<32x128xf32>
    %c0_15 = arith.constant 0 : index
    %c1024 = arith.constant 1024 : index
    %35 = vector.load %arg3[%c0_15, %c1024] : memref<1x3840xf32, #tpu.memory_space<vmem>>, vector<1x128xf32>
    %36 = vector.broadcast %1 : vector<32x1xf32> to vector<32x128xf32>
    %37 = vector.broadcast %35 : vector<1x128xf32> to vector<32x128xf32>
    %38 = arith.mulf %36, %37 : vector<32x128xf32>
    %c0_16 = arith.constant 0 : index
    %c1152 = arith.constant 1152 : index
    %39 = vector.load %arg3[%c0_16, %c1152] : memref<1x3840xf32, #tpu.memory_space<vmem>>, vector<1x128xf32>
    %40 = vector.broadcast %39 : vector<1x128xf32> to vector<32x128xf32>
    %41 = arith.addf %38, %40 : vector<32x128xf32>
    %42 = arith.negf %41 : vector<32x128xf32>
    %43 = math.exp %42 : vector<32x128xf32>
    %cst_17 = arith.constant 1.000000e+00 : f32
    %44 = vector.broadcast %cst_17 : f32 to vector<32x128xf32>
    %45 = arith.addf %44, %43 : vector<32x128xf32>
    %46 = arith.divf %44, %45 : vector<32x128xf32>
    %47 = arith.mulf %41, %46 : vector<32x128xf32>
    %48 = arith.truncf %47 : vector<32x128xf32> to vector<32x128xbf16>
    %c0_18 = arith.constant 0 : index
    %c0_19 = arith.constant 0 : index
    %49 = vector.load %arg5[%c0_18, %c0_19] : memref<128x256xbf16, #tpu.memory_space<vmem>>, vector<128x256xbf16>
    %cst_20 = arith.constant dense<0.000000e+00> : vector<32x256xf32>
    %50 = tpu.matmul %48, %49, %cst_20 {dimension_numbers = #tpu.dot_dimension_numbers<[1], [0], [0], [1], [0, 0, 1, 1], [], []>} : vector<32x128xbf16>, vector<128x256xbf16>, vector<32x256xf32> -> vector<32x256xf32>
    %c0_21 = arith.constant 0 : index
    %c1280 = arith.constant 1280 : index
    %51 = vector.load %arg3[%c0_21, %c1280] : memref<1x3840xf32, #tpu.memory_space<vmem>>, vector<1x256xf32>
    %52 = vector.broadcast %51 : vector<1x256xf32> to vector<32x256xf32>
    %53 = arith.addf %50, %52 : vector<32x256xf32>
    %54 = arith.truncf %34 : vector<32x128xf32> to vector<32x128xbf16>
    %c0_22 = arith.constant 0 : index
    %c0_23 = arith.constant 0 : index
    %55 = vector.load %arg6[%c0_22, %c0_23] : memref<128x256xbf16, #tpu.memory_space<vmem>>, vector<128x256xbf16>
    %cst_24 = arith.constant dense<0.000000e+00> : vector<32x256xf32>
    %56 = tpu.matmul %54, %55, %cst_24 {dimension_numbers = #tpu.dot_dimension_numbers<[1], [0], [0], [1], [0, 0, 1, 1], [], []>} : vector<32x128xbf16>, vector<128x256xbf16>, vector<32x256xf32> -> vector<32x256xf32>
    %57 = arith.truncf %53 : vector<32x256xf32> to vector<32x256xbf16>
    %c0_25 = arith.constant 0 : index
    %c0_26 = arith.constant 0 : index
    %58 = vector.load %arg7[%c0_25, %c0_26] : memref<256x256xbf16, #tpu.memory_space<vmem>>, vector<256x256xbf16>
    %cst_27 = arith.constant dense<0.000000e+00> : vector<32x256xf32>
    %59 = tpu.matmul %57, %58, %cst_27 {dimension_numbers = #tpu.dot_dimension_numbers<[1], [0], [0], [1], [0, 0, 1, 1], [], []>} : vector<32x256xbf16>, vector<256x256xbf16>, vector<32x256xf32> -> vector<32x256xf32>
    %60 = arith.addf %56, %59 : vector<32x256xf32>
    %c0_28 = arith.constant 0 : index
    %c1664 = arith.constant 1664 : index
    %61 = vector.load %arg3[%c0_28, %c1664] : memref<1x3840xf32, #tpu.memory_space<vmem>>, vector<1x256xf32>
    %62 = vector.broadcast %61 : vector<1x256xf32> to vector<32x256xf32>
    %63 = arith.addf %60, %62 : vector<32x256xf32>
    %c0_29 = arith.constant 0 : index
    %c1920 = arith.constant 1920 : index
    %64 = vector.load %arg3[%c0_29, %c1920] : memref<1x3840xf32, #tpu.memory_space<vmem>>, vector<1x256xf32>
    %c0_30 = arith.constant 0 : index
    %c2176 = arith.constant 2176 : index
    %65 = vector.load %arg3[%c0_30, %c2176] : memref<1x3840xf32, #tpu.memory_space<vmem>>, vector<1x256xf32>
    %cst_31 = arith.constant dense<0.000000e+00> : vector<32xf32>
    %66 = vector.multi_reduction <add>, %63, %cst_31 [1] : vector<32x256xf32> to vector<32xf32>
    %67 = vector.shape_cast %66 : vector<32xf32> to vector<32x1xf32>
    %cst_32 = arith.constant 3.906250e-03 : f32
    %68 = vector.broadcast %cst_32 : f32 to vector<32x1xf32>
    %69 = arith.mulf %67, %68 : vector<32x1xf32>
    %70 = vector.broadcast %69 : vector<32x1xf32> to vector<32x256xf32>
    %71 = arith.subf %63, %70 : vector<32x256xf32>
    %72 = arith.mulf %71, %71 : vector<32x256xf32>
    %cst_33 = arith.constant dense<0.000000e+00> : vector<32xf32>
    %73 = vector.multi_reduction <add>, %72, %cst_33 [1] : vector<32x256xf32> to vector<32xf32>
    %74 = vector.shape_cast %73 : vector<32xf32> to vector<32x1xf32>
    %cst_34 = arith.constant 3.906250e-03 : f32
    %75 = vector.broadcast %cst_34 : f32 to vector<32x1xf32>
    %76 = arith.mulf %74, %75 : vector<32x1xf32>
    %cst_35 = arith.constant 9.99999974E-6 : f32
    %77 = vector.broadcast %cst_35 : f32 to vector<32x1xf32>
    %78 = arith.addf %76, %77 : vector<32x1xf32>
    %79 = math.rsqrt %78 : vector<32x1xf32>
    %80 = vector.broadcast %79 : vector<32x1xf32> to vector<32x256xf32>
    %81 = arith.mulf %71, %80 : vector<32x256xf32>
    %82 = vector.broadcast %64 : vector<1x256xf32> to vector<32x256xf32>
    %83 = arith.mulf %81, %82 : vector<32x256xf32>
    %84 = vector.broadcast %65 : vector<1x256xf32> to vector<32x256xf32>
    %85 = arith.addf %83, %84 : vector<32x256xf32>
    %cst_36 = arith.constant 5.000000e-01 : f32
    %86 = vector.broadcast %cst_36 : f32 to vector<32x256xf32>
    %87 = arith.mulf %86, %85 : vector<32x256xf32>
    %cst_37 = arith.constant 4.471500e-02 : f32
    %88 = vector.broadcast %cst_37 : f32 to vector<32x256xf32>
    %89 = arith.mulf %88, %85 : vector<32x256xf32>
    %90 = arith.mulf %89, %85 : vector<32x256xf32>
    %91 = arith.mulf %90, %85 : vector<32x256xf32>
    %92 = arith.addf %85, %91 : vector<32x256xf32>
    %cst_38 = arith.constant 0.797884583 : f32
    %93 = vector.broadcast %cst_38 : f32 to vector<32x256xf32>
    %94 = arith.mulf %93, %92 : vector<32x256xf32>
    %95 = math.tanh %94 : vector<32x256xf32>
    %cst_39 = arith.constant 1.000000e+00 : f32
    %96 = vector.broadcast %cst_39 : f32 to vector<32x256xf32>
    %97 = arith.addf %96, %95 : vector<32x256xf32>
    %98 = arith.mulf %87, %97 : vector<32x256xf32>
    %99 = arith.truncf %98 : vector<32x256xf32> to vector<32x256xbf16>
    %c0_40 = arith.constant 0 : index
    %c0_41 = arith.constant 0 : index
    %100 = vector.load %arg8[%c0_40, %c0_41] : memref<256x256xbf16, #tpu.memory_space<vmem>>, vector<256x256xbf16>
    %cst_42 = arith.constant dense<0.000000e+00> : vector<32x256xf32>
    %101 = tpu.matmul %99, %100, %cst_42 {dimension_numbers = #tpu.dot_dimension_numbers<[1], [0], [0], [1], [0, 0, 1, 1], [], []>} : vector<32x256xbf16>, vector<256x256xbf16>, vector<32x256xf32> -> vector<32x256xf32>
    %c0_43 = arith.constant 0 : index
    %c2432 = arith.constant 2432 : index
    %102 = vector.load %arg3[%c0_43, %c2432] : memref<1x3840xf32, #tpu.memory_space<vmem>>, vector<1x256xf32>
    %103 = vector.broadcast %102 : vector<1x256xf32> to vector<32x256xf32>
    %104 = arith.addf %101, %103 : vector<32x256xf32>
    %c0_44 = arith.constant 0 : index
    %c2688 = arith.constant 2688 : index
    %105 = vector.load %arg3[%c0_44, %c2688] : memref<1x3840xf32, #tpu.memory_space<vmem>>, vector<1x256xf32>
    %c0_45 = arith.constant 0 : index
    %c2944 = arith.constant 2944 : index
    %106 = vector.load %arg3[%c0_45, %c2944] : memref<1x3840xf32, #tpu.memory_space<vmem>>, vector<1x256xf32>
    %cst_46 = arith.constant dense<0.000000e+00> : vector<32xf32>
    %107 = vector.multi_reduction <add>, %104, %cst_46 [1] : vector<32x256xf32> to vector<32xf32>
    %108 = vector.shape_cast %107 : vector<32xf32> to vector<32x1xf32>
    %cst_47 = arith.constant 3.906250e-03 : f32
    %109 = vector.broadcast %cst_47 : f32 to vector<32x1xf32>
    %110 = arith.mulf %108, %109 : vector<32x1xf32>
    %111 = vector.broadcast %110 : vector<32x1xf32> to vector<32x256xf32>
    %112 = arith.subf %104, %111 : vector<32x256xf32>
    %113 = arith.mulf %112, %112 : vector<32x256xf32>
    %cst_48 = arith.constant dense<0.000000e+00> : vector<32xf32>
    %114 = vector.multi_reduction <add>, %113, %cst_48 [1] : vector<32x256xf32> to vector<32xf32>
    %115 = vector.shape_cast %114 : vector<32xf32> to vector<32x1xf32>
    %cst_49 = arith.constant 3.906250e-03 : f32
    %116 = vector.broadcast %cst_49 : f32 to vector<32x1xf32>
    %117 = arith.mulf %115, %116 : vector<32x1xf32>
    %cst_50 = arith.constant 9.99999974E-6 : f32
    %118 = vector.broadcast %cst_50 : f32 to vector<32x1xf32>
    %119 = arith.addf %117, %118 : vector<32x1xf32>
    %120 = math.rsqrt %119 : vector<32x1xf32>
    %121 = vector.broadcast %120 : vector<32x1xf32> to vector<32x256xf32>
    %122 = arith.mulf %112, %121 : vector<32x256xf32>
    %123 = vector.broadcast %105 : vector<1x256xf32> to vector<32x256xf32>
    %124 = arith.mulf %122, %123 : vector<32x256xf32>
    %125 = vector.broadcast %106 : vector<1x256xf32> to vector<32x256xf32>
    %126 = arith.addf %124, %125 : vector<32x256xf32>
    %cst_51 = arith.constant 5.000000e-01 : f32
    %127 = vector.broadcast %cst_51 : f32 to vector<32x256xf32>
    %128 = arith.mulf %127, %126 : vector<32x256xf32>
    %cst_52 = arith.constant 4.471500e-02 : f32
    %129 = vector.broadcast %cst_52 : f32 to vector<32x256xf32>
    %130 = arith.mulf %129, %126 : vector<32x256xf32>
    %131 = arith.mulf %130, %126 : vector<32x256xf32>
    %132 = arith.mulf %131, %126 : vector<32x256xf32>
    %133 = arith.addf %126, %132 : vector<32x256xf32>
    %cst_53 = arith.constant 0.797884583 : f32
    %134 = vector.broadcast %cst_53 : f32 to vector<32x256xf32>
    %135 = arith.mulf %134, %133 : vector<32x256xf32>
    %136 = math.tanh %135 : vector<32x256xf32>
    %cst_54 = arith.constant 1.000000e+00 : f32
    %137 = vector.broadcast %cst_54 : f32 to vector<32x256xf32>
    %138 = arith.addf %137, %136 : vector<32x256xf32>
    %139 = arith.mulf %128, %138 : vector<32x256xf32>
    %140 = arith.truncf %139 : vector<32x256xf32> to vector<32x256xbf16>
    %c0_55 = arith.constant 0 : index
    %c0_56 = arith.constant 0 : index
    %141 = vector.load %arg9[%c0_55, %c0_56] : memref<256x128xbf16, #tpu.memory_space<vmem>>, vector<256x128xbf16>
    %cst_57 = arith.constant dense<0.000000e+00> : vector<32x128xf32>
    %142 = tpu.matmul %140, %141, %cst_57 {dimension_numbers = #tpu.dot_dimension_numbers<[1], [0], [0], [1], [0, 0, 1, 1], [], []>} : vector<32x256xbf16>, vector<256x128xbf16>, vector<32x128xf32> -> vector<32x128xf32>
    %c0_58 = arith.constant 0 : index
    %c3200 = arith.constant 3200 : index
    %143 = vector.load %arg3[%c0_58, %c3200] : memref<1x3840xf32, #tpu.memory_space<vmem>>, vector<1x128xf32>
    %144 = vector.broadcast %143 : vector<1x128xf32> to vector<32x128xf32>
    %145 = arith.addf %142, %144 : vector<32x128xf32>
    %146 = arith.truncf %145 : vector<32x128xf32> to vector<32x128xbf16>
    %c0_59 = arith.constant 0 : index
    %c0_60 = arith.constant 0 : index
    %147 = vector.load %arg10[%c0_59, %c0_60] : memref<128x512xbf16, #tpu.memory_space<vmem>>, vector<128x512xbf16>
    %cst_61 = arith.constant dense<0.000000e+00> : vector<32x512xf32>
    %148 = tpu.matmul %146, %147, %cst_61 {dimension_numbers = #tpu.dot_dimension_numbers<[1], [0], [0], [1], [0, 0, 1, 1], [], []>} : vector<32x128xbf16>, vector<128x512xbf16>, vector<32x512xf32> -> vector<32x512xf32>
    %c0_62 = arith.constant 0 : index
    %c3328 = arith.constant 3328 : index
    %149 = vector.load %arg3[%c0_62, %c3328] : memref<1x3840xf32, #tpu.memory_space<vmem>>, vector<1x512xf32>
    %150 = vector.broadcast %149 : vector<1x512xf32> to vector<32x512xf32>
    %151 = arith.addf %148, %150 : vector<32x512xf32>
    %c0_63 = arith.constant 0 : index
    %c0_64 = arith.constant 0 : index
    %152 = vector.load %arg11[%c0_63, %c0_64] : memref<32x512xf32, #tpu.memory_space<vmem>>, vector<32x512xf32>
    tpu.vector_store %arg11[%c0_63, %c0_64], %151 {strides = array<i32>} : memref<32x512xf32, #tpu.memory_space<vmem>>, vector<32x512xf32>,
    return
  }
  func.func @transform_0(%arg0: i32) -> (i32, i32) {
    %c0_i32 = arith.constant 0 : i32
    %c0_i32_0 = arith.constant 0 : i32
    return %arg0, %c0_i32 : i32, i32
  }
  func.func @transform_1(%arg0: i32) -> (i32, i32) {
    %c0_i32 = arith.constant 0 : i32
    %c0_i32_0 = arith.constant 0 : i32
    return %arg0, %c0_i32 : i32, i32
  }
  func.func @transform_2(%arg0: i32) -> (i32, i32) {
    %c0_i32 = arith.constant 0 : i32
    %c0_i32_0 = arith.constant 0 : i32
    %c0_i32_1 = arith.constant 0 : i32
    return %c0_i32, %c0_i32_0 : i32, i32
  }
  func.func @transform_3(%arg0: i32) -> (i32, i32) {
    %c0_i32 = arith.constant 0 : i32
    %c0_i32_0 = arith.constant 0 : i32
    %c0_i32_1 = arith.constant 0 : i32
    return %c0_i32, %c0_i32_0 : i32, i32
  }
  func.func @transform_4(%arg0: i32) -> (i32, i32) {
    %c0_i32 = arith.constant 0 : i32
    %c0_i32_0 = arith.constant 0 : i32
    %c0_i32_1 = arith.constant 0 : i32
    return %c0_i32, %c0_i32_0 : i32, i32
  }
  func.func @transform_5(%arg0: i32) -> (i32, i32) {
    %c0_i32 = arith.constant 0 : i32
    %c0_i32_0 = arith.constant 0 : i32
    %c0_i32_1 = arith.constant 0 : i32
    return %c0_i32, %c0_i32_0 : i32, i32
  }
  func.func @transform_6(%arg0: i32) -> (i32, i32) {
    %c0_i32 = arith.constant 0 : i32
    %c0_i32_0 = arith.constant 0 : i32
    %c0_i32_1 = arith.constant 0 : i32
    return %c0_i32, %c0_i32_0 : i32, i32
  }
  func.func @transform_7(%arg0: i32) -> (i32, i32) {
    %c0_i32 = arith.constant 0 : i32
    %c0_i32_0 = arith.constant 0 : i32
    %c0_i32_1 = arith.constant 0 : i32
    return %c0_i32, %c0_i32_0 : i32, i32
  }
  func.func @transform_8(%arg0: i32) -> (i32, i32) {
    %c0_i32 = arith.constant 0 : i32
    %c0_i32_0 = arith.constant 0 : i32
    %c0_i32_1 = arith.constant 0 : i32
    return %c0_i32, %c0_i32_0 : i32, i32
  }
  func.func @transform_9(%arg0: i32) -> (i32, i32) {
    %c0_i32 = arith.constant 0 : i32
    %c0_i32_0 = arith.constant 0 : i32
    %c0_i32_1 = arith.constant 0 : i32
    return %c0_i32, %c0_i32_0 : i32, i32
  }
  func.func @transform_10(%arg0: i32) -> (i32, i32) {
    %c0_i32 = arith.constant 0 : i32
    %c0_i32_0 = arith.constant 0 : i32
    return %arg0, %c0_i32 : i32, i32
  }
}

</mosaic_0001>

<llo_original>
// kernel: tpu_custom_call.1
$region0: #{tpu_custom_call.1}
  #allocation0 [shape = 'u32[]', space=smem, size = 0x4, offset = 0x4, fixed_abs, tag = 'smem constant byte address 0x4 - core index']
  #allocation1 [shape = 'u32[144,128]{1,0:T(1,128)}', space=vmem, size = 0x12000, scoped, tag = 'internal scratch']
  %s0 = inlined_call_operand.hbm [shape: f32[16,128], index: 0, kind: input, shape index: {}]
  %s1 = inlined_call_operand.hbm [shape: f32[8,128], index: 1, kind: input, shape index: {}]
  %s2 = inlined_call_operand.hbm [shape: f32[16,128], index: 2, kind: output, shape index: {}]
  %s3 = sld [smem:[#allocation0]]
  $region49: #{tpu_custom_call.1} parent=0
    _
  %s5 = ssub.s32 1, %s3
  %s6 = scalar_select 0, %s5, %s3
  $region1: #{tpu_custom_call.1} parent=0
    #allocation2 [shape = 'u8[8192]{0}', space=vmem, size = 0x2000, scoped, tag = 'input window, operand 0']
    #allocation3 [shape = 's32[2]{0}', space=sflag, size = 0x8, scoped, tag = 'scoped memory for tpu_custom_call.1']
    #allocation4 [shape = 's32[2]{0}', space=sflag, size = 0x8, scoped, tag = 'scoped memory for tpu_custom_call.1']
    #allocation5 [shape = 'u8[4096]{0}', space=vmem, size = 0x1000, scoped, tag = 'input window, operand 1, single buffered']
    #allocation6 [shape = 's32[1]{0}', space=sflag, size = 0x4, scoped, tag = 'scoped memory for tpu_custom_call.1']
    #allocation7 [shape = 'u8[8192]{0}', space=vmem, size = 0x2000, scoped, tag = 'output window, operand 0']
    %7 = vsyncpa [#allocation3], 0
    %s8 = scalar_lea.sflag [#allocation3], 1
    %9 = vsyncpa %s8, 0
    %10 = vsyncpa [#allocation6], 0
    %11 = vsyncpa [#allocation4], 0
    %s12 = scalar_lea.sflag [#allocation4], 1
    %13 = vsyncpa %s12, 0
    loop: start=0, step=1, limit=4
    $region2: #{tpu_custom_call.1} parent=1 // loop_pre_header
      _
    $region3: #{tpu_custom_call.1} parent=1 // loop_header
      %s15 = sphi 0, %s19
      %p16 = scmp.ge.s32.totalorder %s15, 4
      %s25 = sphi 0, %s27
      %s28 = sphi 0, %s25
      %s29 = sphi 0, %s28
      %s45 = sphi 0, %s29
      %s49 = sphi 0, %s49
      %s51 = sphi 0, %s49
      %s52 = sphi 0, %s51
      %s66 = sphi 0, %s52
      %s72 = sphi 0, %s74
      %s75 = sphi 0, %s72
      %s76 = sphi 0, %s75
      %s92 = sphi 0, %s76
    $region4: #{tpu_custom_call.1} parent=1 // loop_header_branch
      %18 = sbr.rel (%p16) target = $region8
    $region5: #{tpu_custom_call.1} parent=1 // loop_body
      %s20 = ssub.s32 %s15, 1
      %s21 = ssub.s32 %s15, 2
      %s22 = sadd.s32 %s15, 1
      %s23 = ssub.s32 %s15, %s22
      %p24 = scmp.eq.s32.totalorder %s23, 0
      %s26 = sadd.s32 %s25, 1
      %s27 = scalar_select %p24, %s25, %s26
      %p30 = pneg %p24
      %p31 = scmp.eq.s32.totalorder %s15, 1
      %p32 = por %p30, %p31
      %p33 = scmp.ne.s32.totalorder %s25, %s28
      %p34 = scmp.eq.s32.totalorder %s15, 0
      %p35 = por %p33, %p34
      %p36 = scmp.ne.s32.totalorder %s25, %s28
      %p37 = scmp.eq.s32.totalorder %s20, 1
      %p38 = por %p36, %p37
      %p39 = scmp.ne.s32.totalorder %s28, %s29
      %p40 = scmp.eq.s32.totalorder %s20, 0
      %p41 = por %p39, %p40
      %p42 = scmp.ne.s32.totalorder %s28, %s29
      %p43 = scmp.eq.s32.totalorder %s21, 1
      %p44 = por %p42, %p43
      %p46 = scmp.ne.s32.totalorder %s29, %s45
      %p47 = scmp.eq.s32.totalorder %s21, 0
      %p48 = por %p46, %p47
      %s50 = sadd.s32 %s49, 1
      %p53 = scmp.eq.s32.totalorder %s15, 1
      %p54 = scmp.ne.s32.totalorder %s49, %s51
      %p55 = scmp.eq.s32.totalorder %s15, 0
      %p56 = por %p54, %p55
      %p57 = scmp.ne.s32.totalorder %s49, %s51
      %p58 = scmp.eq.s32.totalorder %s20, 1
      %p59 = por %p57, %p58
      %p60 = scmp.ne.s32.totalorder %s51, %s52
      %p61 = scmp.eq.s32.totalorder %s20, 0
      %p62 = por %p60, %p61
      %p63 = scmp.ne.s32.totalorder %s51, %s52
      %p64 = scmp.eq.s32.totalorder %s21, 1
      %p65 = por %p63, %p64
      %p67 = scmp.ne.s32.totalorder %s52, %s66
      %p68 = scmp.eq.s32.totalorder %s21, 0
      %p69 = por %p67, %p68
      %s70 = ssub.s32 %s15, %s22
      %p71 = scmp.eq.s32.totalorder %s70, 0
      %s73 = sadd.s32 %s72, 1
      %s74 = scalar_select %p71, %s72, %s73
      %p77 = pneg %p71
      %p78 = scmp.eq.s32.totalorder %s15, 1
      %p79 = por %p77, %p78
      %p80 = scmp.ne.s32.totalorder %s72, %s75
      %p81 = scmp.eq.s32.totalorder %s15, 0
      %p82 = por %p80, %p81
      %p83 = scmp.ne.s32.totalorder %s72, %s75
      %p84 = scmp.eq.s32.totalorder %s20, 1
      %p85 = por %p83, %p84
      %p86 = scmp.ne.s32.totalorder %s75, %s76
      %p87 = scmp.eq.s32.totalorder %s20, 0
      %p88 = por %p86, %p87
      %p89 = scmp.ne.s32.totalorder %s75, %s76
      %p90 = scmp.eq.s32.totalorder %s21, 1
      %p91 = por %p89, %p90
      %p93 = scmp.ne.s32.totalorder %s76, %s92
      %p94 = scmp.eq.s32.totalorder %s21, 0
      %p95 = por %p93, %p94
      %p96 = scmp.le.s32.totalorder 1, %s15
      %p97 = scmp.lt.s32.totalorder %s15, 3
      %p98 = pnand %p96, %p97
      %p99 = pneg %p98
      // Predicated region
      $region9: #{tpu_custom_call.1} parent=5 // pred_check
        _
      $region10: #{tpu_custom_call.1} parent=5 // pred_check_branch
        %101 = sbr.rel (%p98) target = $region12
      $region11: #{tpu_custom_call.1} parent=5 // pred_region
        %s102 = ssub.s32 %s15, 1
        // Predicated region
        $region13: #{tpu_custom_call.1} parent=11 // pred_check
          %p103 = pneg %p62
        $region14: #{tpu_custom_call.1} parent=11 // pred_check_branch
          %105 = sbr.rel (%p103) target = $region16
        $region15: #{tpu_custom_call.1} parent=11 // pred_region
          %s107 = ssub.s32 128, 128
          %108 = vsyncadd [#allocation6], %s107
          %s110 = sshll.u32 [#allocation5], 4
          %s111 = int_to_ptr.vmem [resolvable:$true] %s110
          %113 = dma.hbm_to_vmem [thread:$0]  %s1, 128, %s111, [#allocation6]
        $region16: #{tpu_custom_call.1} parent=11 // pred_fallthru
          _
      $region12: #{tpu_custom_call.1} parent=5 // pred_fallthru
        _
      %p114 = scmp.lt.s32.totalorder %s15, 2
      // Predicated region
      $region17: #{tpu_custom_call.1} parent=5 // pred_check
        %p115 = pneg %p114
      $region18: #{tpu_custom_call.1} parent=5 // pred_check_branch
        %117 = sbr.rel (%p115) target = $region20
      $region19: #{tpu_custom_call.1} parent=5 // pred_region
        // Predicated region
        $region21: #{tpu_custom_call.1} parent=19 // pred_check
          %p118 = pneg %p35
        $region22: #{tpu_custom_call.1} parent=19 // pred_check_branch
          %120 = sbr.rel (%p118) target = $region24
        $region23: #{tpu_custom_call.1} parent=19 // pred_region
          %s121 = sand.u32 %s25, 1
          %s122 = scalar_lea.sflag [#allocation3], %s121
          %s123 = sand.u32 %s25, 1
          %s124 = smul.addr %s123, 8
          %s125 = scalar_lea.vmem [#allocation2], %s124
          %s127 = ssub.s32 128, 128
          %128 = vsyncadd %s122, %s127
          %s129 = smul.addr %s15, 128
          %s130 = scalar_lea.hbm %s0, %s129
          %s132 = sshll.u32 %s125, 4
          %s133 = int_to_ptr.vmem [resolvable:$true] %s132
          %135 = dma.hbm_to_vmem [thread:$0]  %s130, 128, %s133, %s122
        $region24: #{tpu_custom_call.1} parent=19 // pred_fallthru
          _
      $region20: #{tpu_custom_call.1} parent=5 // pred_fallthru
        _
      %p136 = scmp.le.s32.totalorder 1, %s15
      %p137 = scmp.lt.s32.totalorder %s15, 3
      %p138 = pnand %p136, %p137
      %p139 = pneg %p138
      // Predicated region
      $region25: #{tpu_custom_call.1} parent=5 // pred_check
        _
      $region26: #{tpu_custom_call.1} parent=5 // pred_check_branch
        %141 = sbr.rel (%p138) target = $region28
      $region27: #{tpu_custom_call.1} parent=5 // pred_region
        %s142 = ssub.s32 %s15, 1
        %s143 = sand.u32 %s28, 1
        %s144 = scalar_lea.sflag [#allocation3], %s143
        %s145 = sand.u32 %s28, 1
        %s146 = smul.addr %s145, 8
        %s147 = scalar_lea.vmem [#allocation2], %s146
        // Predicated region
        $region29: #{tpu_custom_call.1} parent=27 // pred_check
          %p148 = pneg %p41
        $region30: #{tpu_custom_call.1} parent=27 // pred_check_branch
          %150 = sbr.rel (%p148) target = $region32
        $region31: #{tpu_custom_call.1} parent=27 // pred_region
          %151 = dma.done %s144, 128
        $region32: #{tpu_custom_call.1} parent=27 // pred_fallthru
          _
        // Predicated region
        $region33: #{tpu_custom_call.1} parent=27 // pred_check
          %p152 = pneg %p62
        $region34: #{tpu_custom_call.1} parent=27 // pred_check_branch
          %154 = sbr.rel (%p152) target = $region36
        $region35: #{tpu_custom_call.1} parent=27 // pred_region
          %155 = dma.done [#allocation6], 128
        $region36: #{tpu_custom_call.1} parent=27 // pred_fallthru
          _
        %s156 = sand.u32 %s28, 1
        %s157 = scalar_lea.sflag [#allocation3], %s156
        %s158 = sand.u32 %s28, 1
        %s159 = smul.addr %s158, 8
        %s160 = scalar_lea.vmem [#allocation2], %s159
        %p161 = pneg %p41
        %p162 = pneg %p38
        %p163 = pneg %p62
        %p164 = pneg %p59
        %p165 = pneg %p88
        %p166 = pneg %p85
        %s167 = sand.u32 %s75, 1
        %s168 = scalar_lea.sflag [#allocation4], %s167
        %s169 = sand.u32 %s75, 1
        %s170 = smul.addr %s169, 8
        %s171 = scalar_lea.vmem [#allocation7], %s170
        %v172 = vld [vmem:[%s147] sm:$0xff]
        %v173 = vld [vmem:[#allocation5] sm:$0xff]
        %v174 = vadd.f32 %v172, %v173
        %175 = vst [vmem:[%s171] sm:$0xff] %v174
        %s176 = sand.u32 %s75, 1
        %s177 = scalar_lea.sflag [#allocation4], %s176
        %s178 = sand.u32 %s75, 1
        %s179 = smul.addr %s178, 8
        %s180 = scalar_lea.vmem [#allocation7], %s179
        // Predicated region
        $region37: #{tpu_custom_call.1} parent=27 // pred_check
          %p181 = pneg %p85
        $region38: #{tpu_custom_call.1} parent=27 // pred_check_branch
          %183 = sbr.rel (%p181) target = $region40
        $region39: #{tpu_custom_call.1} parent=27 // pred_region
          %s185 = ssub.s32 128, 128
          %186 = vsyncadd %s177, %s185
          %s187 = smul.addr %s20, 128
          %s188 = scalar_lea.hbm %s2, %s187
          %s190 = sshll.u32 %s180, 4
          %s191 = int_to_ptr.vmem [resolvable:$true] %s190
          %193 = dma.vmem_to_hbm [thread:$0]  %s191, 128, %s188, %s177
        $region40: #{tpu_custom_call.1} parent=27 // pred_fallthru
          _
      $region28: #{tpu_custom_call.1} parent=5 // pred_fallthru
        _
      %p194 = scmp.le.s32.totalorder 2, %s15
      // Predicated region
      $region41: #{tpu_custom_call.1} parent=5 // pred_check
        %p195 = pneg %p194
      $region42: #{tpu_custom_call.1} parent=5 // pred_check_branch
        %197 = sbr.rel (%p195) target = $region44
      $region43: #{tpu_custom_call.1} parent=5 // pred_region
        %s198 = ssub.s32 %s15, 2
        // Predicated region
        $region45: #{tpu_custom_call.1} parent=43 // pred_check
          %p199 = pneg %p91
        $region46: #{tpu_custom_call.1} parent=43 // pred_check_branch
          %201 = sbr.rel (%p199) target = $region48
        $region47: #{tpu_custom_call.1} parent=43 // pred_region
          %s202 = sand.u32 %s76, 1
          %s203 = scalar_lea.sflag [#allocation4], %s202
          %s204 = sand.u32 %s76, 1
          %s205 = smul.addr %s204, 8
          %s206 = scalar_lea.vmem [#allocation7], %s205
          %207 = dma.done %s203, 128
        $region48: #{tpu_custom_call.1} parent=43 // pred_fallthru
          _
      $region44: #{tpu_custom_call.1} parent=5 // pred_fallthru
        _
    $region6: #{tpu_custom_call.1} parent=1 // loop_footer
      %s19 = sadd.s32 1, %s15
    $region7: #{tpu_custom_call.1} parent=1 // loop_footer_branch
      %14 = sbr.rel target = $region3
    $region8: #{tpu_custom_call.1} parent=1 // loop_exit
      _
    %208 = vsyncpa [#allocation3], 1
    %s209 = scalar_lea.sflag [#allocation3], 1
    %210 = vsyncpa %s209, 1
    %211 = vsyncpa [#allocation6], 1
    %212 = vsyncpa [#allocation4], 1
    %s213 = scalar_lea.sflag [#allocation4], 1
    %214 = vsyncpa %s213, 1

// kernel: tpu_custom_call.1
$region0: #{tpu_custom_call.1}
  #allocation0 [shape = 'u32[]', space=smem, size = 0x4, offset = 0x4, fixed_abs, tag = 'smem constant byte address 0x4 - core index']
  #allocation1 [shape = 'u32[144,128]{1,0:T(1,128)}', space=vmem, size = 0x12000, scoped, tag = 'internal scratch']
  %s0 = inlined_call_operand.hbm [shape: f32[32,512], index: 0, kind: input, shape index: {}]
  %s1 = inlined_call_operand.vmem [shape: f32[32,1], index: 1, kind: input, shape index: {}]
  %s2 = inlined_call_operand.vmem [shape: f32[1,3840], index: 2, kind: input, shape index: {}]
  %s3 = inlined_call_operand.hbm [shape: bf16[512,128], index: 3, kind: input, shape index: {}]
  %s4 = inlined_call_operand.hbm [shape: bf16[128,256], index: 4, kind: input, shape index: {}]
  %s5 = inlined_call_operand.hbm [shape: bf16[128,256], index: 5, kind: input, shape index: {}]
  %s6 = inlined_call_operand.hbm [shape: bf16[256,256], index: 6, kind: input, shape index: {}]
  %s7 = inlined_call_operand.hbm [shape: bf16[256,256], index: 7, kind: input, shape index: {}]
  %s8 = inlined_call_operand.hbm [shape: bf16[256,128], index: 8, kind: input, shape index: {}]
  %s9 = inlined_call_operand.hbm [shape: bf16[128,512], index: 9, kind: input, shape index: {}]
  %s10 = inlined_call_operand.hbm [shape: f32[32,512], index: 10, kind: output, shape index: {}]
  %s11 = sld [smem:[#allocation0]]
  $region82: #{tpu_custom_call.1} parent=0
    _
  %s13 = ssub.s32 1, %s11
  %s14 = scalar_select 0, %s13, %s11
  $region1: #{tpu_custom_call.1} parent=0
    #allocation2 [shape = 'u8[65536]{0}', space=vmem, size = 0x10000, scoped, tag = 'input window, operand 0, single buffered']
    #allocation3 [shape = 's32[1]{0}', space=sflag, size = 0x4, scoped, tag = 'scoped memory for tpu_custom_call.1']
    #allocation4 [shape = 's32[1]{0}', space=sflag, size = 0x4, scoped, tag = 'scoped memory for tpu_custom_call.1']
    #allocation5 [shape = 'u8[131072]{0}', space=vmem, size = 0x20000, scoped, tag = 'input window, operand 3, single buffered']
    #allocation6 [shape = 's32[1]{0}', space=sflag, size = 0x4, scoped, tag = 'scoped memory for tpu_custom_call.1']
    #allocation7 [shape = 'u8[65536]{0}', space=vmem, size = 0x10000, scoped, tag = 'input window, operand 4, single buffered']
    #allocation8 [shape = 'u8[65536]{0}', space=vmem, size = 0x10000, scoped, tag = 'input window, operand 5, single buffered']
    #allocation9 [shape = 's32[1]{0}', space=sflag, size = 0x4, scoped, tag = 'scoped memory for tpu_custom_call.1']
    #allocation10 [shape = 'u8[131072]{0}', space=vmem, size = 0x20000, scoped, tag = 'input window, operand 6, single buffered']
    #allocation11 [shape = 'u8[131072]{0}', space=vmem, size = 0x20000, scoped, tag = 'input window, operand 7, single buffered']
    #allocation12 [shape = 's32[1]{0}', space=sflag, size = 0x4, scoped, tag = 'scoped memory for tpu_custom_call.1']
    #allocation13 [shape = 'u8[65536]{0}', space=vmem, size = 0x10000, scoped, tag = 'input window, operand 8, single buffered']
    #allocation14 [shape = 'u8[131072]{0}', space=vmem, size = 0x20000, scoped, tag = 'input window, operand 9, single buffered']
    #allocation15 [shape = 's32[1]{0}', space=sflag, size = 0x4, scoped, tag = 'scoped memory for tpu_custom_call.1']
    #allocation16 [shape = 'u8[65536]{0}', space=vmem, size = 0x10000, scoped, tag = 'output window, operand 0, single buffered']
    %15 = vsyncpa [#allocation3], 0
    %16 = vsyncpa [#allocation6], 0
    %17 = vsyncpa [#allocation9], 0
    %18 = vsyncpa [#allocation12], 0
    %19 = vsyncpa [#allocation15], 0
    %20 = vsyncpa [#allocation4], 0
    // Predicated region
    $region2: #{tpu_custom_call.1} parent=1 // pred_check
      _
    $region3: #{tpu_custom_call.1} parent=1 // pred_check_branch
      %22 = sbr.rel (0) target = $region5
    $region4: #{tpu_custom_call.1} parent=1 // pred_region
      %s24 = ssub.s32 2048, 2048
      %25 = vsyncadd [#allocation3], %s24
      %s26 = sshll.u32 [#allocation2], 4
      %s27 = int_to_ptr.vmem [resolvable:$true] %s26
      %32 = dma.hbm_to_vmem [thread:$0]  %s0, 2048, %s27, [#allocation3], 512, 512, 32
    $region5: #{tpu_custom_call.1} parent=1 // pred_fallthru
      _
    // Predicated region
    $region6: #{tpu_custom_call.1} parent=1 // pred_check
      _
    $region7: #{tpu_custom_call.1} parent=1 // pred_check_branch
      %34 = sbr.rel (0) target = $region9
    $region8: #{tpu_custom_call.1} parent=1 // pred_region
      _
    $region9: #{tpu_custom_call.1} parent=1 // pred_fallthru
      _
    // Predicated region
    $region10: #{tpu_custom_call.1} parent=1 // pred_check
      _
    $region11: #{tpu_custom_call.1} parent=1 // pred_check_branch
      %36 = sbr.rel (0) target = $region13
    $region12: #{tpu_custom_call.1} parent=1 // pred_region
      _
    $region13: #{tpu_custom_call.1} parent=1 // pred_fallthru
      _
    // Predicated region
    $region14: #{tpu_custom_call.1} parent=1 // pred_check
      _
    $region15: #{tpu_custom_call.1} parent=1 // pred_check_branch
      %38 = sbr.rel (0) target = $region17
    $region16: #{tpu_custom_call.1} parent=1 // pred_region
      %s40 = ssub.s32 4096, 4096
      %41 = vsyncadd [#allocation6], %s40
      %s42 = sshll.u32 [#allocation5], 4
      %s43 = int_to_ptr.vmem [resolvable:$true] %s42
      %48 = dma.hbm_to_vmem [thread:$0]  %s3, 4096, %s43, [#allocation6], 64, 64, 4
    $region17: #{tpu_custom_call.1} parent=1 // pred_fallthru
      _
    // Predicated region
    $region18: #{tpu_custom_call.1} parent=1 // pred_check
      _
    $region19: #{tpu_custom_call.1} parent=1 // pred_check_branch
      %50 = sbr.rel (0) target = $region21
    $region20: #{tpu_custom_call.1} parent=1 // pred_region
      %s52 = ssub.s32 2048, 2048
      %53 = vsyncadd [#allocation6], %s52
      %s54 = sshll.u32 [#allocation7], 4
      %s55 = int_to_ptr.vmem [resolvable:$true] %s54
      %60 = dma.hbm_to_vmem [thread:$0]  %s4, 2048, %s55, [#allocation6], 128, 128, 8
    $region21: #{tpu_custom_call.1} parent=1 // pred_fallthru
      _
    // Predicated region
    $region22: #{tpu_custom_call.1} parent=1 // pred_check
      _
    $region23: #{tpu_custom_call.1} parent=1 // pred_check_branch
      %62 = sbr.rel (0) target = $region25
    $region24: #{tpu_custom_call.1} parent=1 // pred_region
      %s64 = ssub.s32 2048, 2048
      %65 = vsyncadd [#allocation9], %s64
      %s66 = sshll.u32 [#allocation8], 4
      %s67 = int_to_ptr.vmem [resolvable:$true] %s66
      %72 = dma.hbm_to_vmem [thread:$0]  %s5, 2048, %s67, [#allocation9], 128, 128, 8
    $region25: #{tpu_custom_call.1} parent=1 // pred_fallthru
      _
    // Predicated region
    $region26: #{tpu_custom_call.1} parent=1 // pred_check
      _
    $region27: #{tpu_custom_call.1} parent=1 // pred_check_branch
      %74 = sbr.rel (0) target = $region29
    $region28: #{tpu_custom_call.1} parent=1 // pred_region
      %s76 = ssub.s32 4096, 4096
      %77 = vsyncadd [#allocation9], %s76
      %s78 = sshll.u32 [#allocation10], 4
      %s79 = int_to_ptr.vmem [resolvable:$true] %s78
      %84 = dma.hbm_to_vmem [thread:$0]  %s6, 4096, %s79, [#allocation9], 128, 128, 8
    $region29: #{tpu_custom_call.1} parent=1 // pred_fallthru
      _
    // Predicated region
    $region30: #{tpu_custom_call.1} parent=1 // pred_check
      _
    $region31: #{tpu_custom_call.1} parent=1 // pred_check_branch
      %86 = sbr.rel (0) target = $region33
    $region32: #{tpu_custom_call.1} parent=1 // pred_region
      %s88 = ssub.s32 4096, 4096
      %89 = vsyncadd [#allocation12], %s88
      %s90 = sshll.u32 [#allocation11], 4
      %s91 = int_to_ptr.vmem [resolvable:$true] %s90
      %96 = dma.hbm_to_vmem [thread:$0]  %s7, 4096, %s91, [#allocation12], 128, 128, 8
    $region33: #{tpu_custom_call.1} parent=1 // pred_fallthru
      _
    // Predicated region
    $region34: #{tpu_custom_call.1} parent=1 // pred_check
      _
    $region35: #{tpu_custom_call.1} parent=1 // pred_check_branch
      %98 = sbr.rel (0) target = $region37
    $region36: #{tpu_custom_call.1} parent=1 // pred_region
      %s100 = ssub.s32 2048, 2048
      %101 = vsyncadd [#allocation12], %s100
      %s102 = sshll.u32 [#allocation13], 4
      %s103 = int_to_ptr.vmem [resolvable:$true] %s102
      %108 = dma.hbm_to_vmem [thread:$0]  %s8, 2048, %s103, [#allocation12], 64, 64, 4
    $region37: #{tpu_custom_call.1} parent=1 // pred_fallthru
      _
    // Predicated region
    $region38: #{tpu_custom_call.1} parent=1 // pred_check
      _
    $region39: #{tpu_custom_call.1} parent=1 // pred_check_branch
      %110 = sbr.rel (0) target = $region41
    $region40: #{tpu_custom_call.1} parent=1 // pred_region
      %s112 = ssub.s32 4096, 4096
      %113 = vsyncadd [#allocation15], %s112
      %s114 = sshll.u32 [#allocation14], 4
      %s115 = int_to_ptr.vmem [resolvable:$true] %s114
      %120 = dma.hbm_to_vmem [thread:$0]  %s9, 4096, %s115, [#allocation15], 256, 256, 16
    $region41: #{tpu_custom_call.1} parent=1 // pred_fallthru
      _
    // Predicated region
    $region42: #{tpu_custom_call.1} parent=1 // pred_check
      _
    $region43: #{tpu_custom_call.1} parent=1 // pred_check_branch
      %122 = sbr.rel (0) target = $region45
    $region44: #{tpu_custom_call.1} parent=1 // pred_region
      %123 = dma.done [#allocation3], 2048
    $region45: #{tpu_custom_call.1} parent=1 // pred_fallthru
      _
    // Predicated region
    $region46: #{tpu_custom_call.1} parent=1 // pred_check
      _
    $region47: #{tpu_custom_call.1} parent=1 // pred_check_branch
      %125 = sbr.rel (0) target = $region49
    $region48: #{tpu_custom_call.1} parent=1 // pred_region
      %126 = dma.done [#allocation6], 4096
    $region49: #{tpu_custom_call.1} parent=1 // pred_fallthru
      _
    // Predicated region
    $region50: #{tpu_custom_call.1} parent=1 // pred_check
      _
    $region51: #{tpu_custom_call.1} parent=1 // pred_check_branch
      %128 = sbr.rel (0) target = $region53
    $region52: #{tpu_custom_call.1} parent=1 // pred_region
      %129 = dma.done [#allocation6], 2048
    $region53: #{tpu_custom_call.1} parent=1 // pred_fallthru
      _
    // Predicated region
    $region54: #{tpu_custom_call.1} parent=1 // pred_check
      _
    $region55: #{tpu_custom_call.1} parent=1 // pred_check_branch
      %131 = sbr.rel (0) target = $region57
    $region56: #{tpu_custom_call.1} parent=1 // pred_region
      %132 = dma.done [#allocation9], 2048
    $region57: #{tpu_custom_call.1} parent=1 // pred_fallthru
      _
    // Predicated region
    $region58: #{tpu_custom_call.1} parent=1 // pred_check
      _
    $region59: #{tpu_custom_call.1} parent=1 // pred_check_branch
      %134 = sbr.rel (0) target = $region61
    $region60: #{tpu_custom_call.1} parent=1 // pred_region
      %135 = dma.done [#allocation9], 4096
    $region61: #{tpu_custom_call.1} parent=1 // pred_fallthru
      _
    // Predicated region
    $region62: #{tpu_custom_call.1} parent=1 // pred_check
      _
    $region63: #{tpu_custom_call.1} parent=1 // pred_check_branch
      %137 = sbr.rel (0) target = $region65
    $region64: #{tpu_custom_call.1} parent=1 // pred_region
      %138 = dma.done [#allocation12], 4096
    $region65: #{tpu_custom_call.1} parent=1 // pred_fallthru
      _
    // Predicated region
    $region66: #{tpu_custom_call.1} parent=1 // pred_check
      _
    $region67: #{tpu_custom_call.1} parent=1 // pred_check_branch
      %140 = sbr.rel (0) target = $region69
    $region68: #{tpu_custom_call.1} parent=1 // pred_region
      %141 = dma.done [#allocation12], 2048
    $region69: #{tpu_custom_call.1} parent=1 // pred_fallthru
      _
    // Predicated region
    $region70: #{tpu_custom_call.1} parent=1 // pred_check
      _
    $region71: #{tpu_custom_call.1} parent=1 // pred_check_branch
      %143 = sbr.rel (0) target = $region73
    $region72: #{tpu_custom_call.1} parent=1 // pred_region
      %144 = dma.done [#allocation15], 4096
    $region73: #{tpu_custom_call.1} parent=1 // pred_fallthru
      _
    %v146 = vld [vmem:[#allocation2] sm:$0xff]
    %v147 = vld [vmem:[#allocation2 + $0x8] sm:$0xff]
    %v148 = vld [vmem:[#allocation2 + $0x10] sm:$0xff]
    %v149 = vld [vmem:[#allocation2 + $0x18] sm:$0xff]
    %v150 = vld [vmem:[#allocation2 + $0x20] sm:$0xff]
    %v151 = vld [vmem:[#allocation2 + $0x28] sm:$0xff]
    %v152 = vld [vmem:[#allocation2 + $0x30] sm:$0xff]
    %v153 = vld [vmem:[#allocation2 + $0x38] sm:$0xff]
    %v154 = vld [vmem:[#allocation2 + $0x40] sm:$0xff]
    %v155 = vld [vmem:[#allocation2 + $0x48] sm:$0xff]
    %v156 = vld [vmem:[#allocation2 + $0x50] sm:$0xff]
    %v157 = vld [vmem:[#allocation2 + $0x58] sm:$0xff]
    %v158 = vld [vmem:[#allocation2 + $0x60] sm:$0xff]
    %v159 = vld [vmem:[#allocation2 + $0x68] sm:$0xff]
    %v160 = vld [vmem:[#allocation2 + $0x70] sm:$0xff]
    %v161 = vld [vmem:[#allocation2 + $0x78] sm:$0xff]
    %v162 = vld [vmem:[%s1] sm:$0xff]
    %v163 = vld [vmem:[%s1 + $0x8] sm:$0xff]
    %v164 = vld [vmem:[%s1 + $0x10] sm:$0xff]
    %v165 = vld [vmem:[%s1 + $0x18] sm:$0xff]
    %v166 = vld [vmem:[%s2] sm:$0xf]
    %v167 = vld [vmem:[%s2 + $0x4] sm:$0xf]
    %v168 = vadd.f32 %v146, %v147
    %v169 = vadd.f32 %v168, %v148
    %v170 = vadd.f32 %v169, %v149
    %171 = vadd.xlane.f32.xlu0 %v170
    %v172 = vpop.xlane.xlu0 %171
    %v173 = vadd.f32 %v150, %v151
    %v174 = vadd.f32 %v173, %v152
    %v175 = vadd.f32 %v174, %v153
    %176 = vadd.xlane.f32.xlu0 %v175
    %v177 = vpop.xlane.xlu0 %176
    %v178 = vadd.f32 %v154, %v155
    %v179 = vadd.f32 %v178, %v156
    %v180 = vadd.f32 %v179, %v157
    %181 = vadd.xlane.f32.xlu0 %v180
    %v182 = vpop.xlane.xlu0 %181
    %v183 = vadd.f32 %v158, %v159
    %v184 = vadd.f32 %v183, %v160
    %v185 = vadd.f32 %v184, %v161
    %186 = vadd.xlane.f32.xlu0 %v185
    %v187 = vpop.xlane.xlu0 %186
    %v188 = vmul.f32 %v172, 0.002232143
    %v189 = vmul.f32 %v177, 0.002232143
    %v190 = vmul.f32 %v182, 0.002232143
    %v191 = vmul.f32 %v187, 0.002232143
    %v192 = vsub.f32 %v146, %v188
    %v193 = vsub.f32 %v147, %v188
    %v194 = vsub.f32 %v148, %v188
    %v195 = vsub.f32 %v149, %v188
    %v196 = vsub.f32 %v150, %v189
    %v197 = vsub.f32 %v151, %v189
    %v198 = vsub.f32 %v152, %v189
    %v199 = vsub.f32 %v153, %v189
    %v200 = vsub.f32 %v154, %v190
    %v201 = vsub.f32 %v155, %v190
    %v202 = vsub.f32 %v156, %v190
    %v203 = vsub.f32 %v157, %v190
    %v204 = vsub.f32 %v158, %v191
    %v205 = vsub.f32 %v159, %v191
    %v206 = vsub.f32 %v160, %v191
    %v207 = vsub.f32 %v161, %v191
    %v208 = vlaneseq
    %v209 = vand.u32 %v208, 127
    %v210 = vadd.s32 %v209, 128
    %v211 = vadd.s32 %v209, 256
    %v212 = vadd.s32 %v209, 384
    %vm213 = vcmp.lt.s32.totalorder %v209, 448
    %vm214 = vcmp.lt.s32.totalorder %v210, 448
    %vm215 = vcmp.lt.s32.totalorder %v211, 448
    %vm216 = vcmp.lt.s32.totalorder %v212, 448
    %v217 = vsel %vm213, %v192, 0.0
    %v218 = vsel %vm214, %v193, 0.0
    %v219 = vsel %vm215, %v194, 0.0
    %v220 = vsel %vm216, %v195, 0.0
    %v221 = vsel %vm213, %v196, 0.0
    %v222 = vsel %vm214, %v197, 0.0
    %v223 = vsel %vm215, %v198, 0.0
    %v224 = vsel %vm216, %v199, 0.0
    %v225 = vsel %vm213, %v200, 0.0
    %v226 = vsel %vm214, %v201, 0.0
    %v227 = vsel %vm215, %v202, 0.0
    %v228 = vsel %vm216, %v203, 0.0
    %v229 = vsel %vm213, %v204, 0.0
    %v230 = vsel %vm214, %v205, 0.0
    %v231 = vsel %vm215, %v206, 0.0
    %v232 = vsel %vm216, %v207, 0.0
    %v233 = vmul.f32 %v217, %v217
    %v234 = vmul.f32 %v218, %v218
    %v235 = vmul.f32 %v219, %v219
    %v236 = vmul.f32 %v220, %v220
    %v237 = vmul.f32 %v221, %v221
    %v238 = vmul.f32 %v222, %v222
    %v239 = vmul.f32 %v223, %v223
    %v240 = vmul.f32 %v224, %v224
    %v241 = vmul.f32 %v225, %v225
    %v242 = vmul.f32 %v226, %v226
    %v243 = vmul.f32 %v227, %v227
    %v244 = vmul.f32 %v228, %v228
    %v245 = vmul.f32 %v229, %v229
    %v246 = vmul.f32 %v230, %v230
    %v247 = vmul.f32 %v231, %v231
    %v248 = vmul.f32 %v232, %v232
    %v249 = vadd.f32 %v233, %v234
    %v250 = vadd.f32 %v249, %v235
    %v251 = vadd.f32 %v250, %v236
    %252 = vadd.xlane.f32.xlu0 %v251
    %v253 = vpop.xlane.xlu0 %252
    %v254 = vadd.f32 %v237, %v238
    %v255 = vadd.f32 %v254, %v239
    %v256 = vadd.f32 %v255, %v240
    %257 = vadd.xlane.f32.xlu0 %v256
    %v258 = vpop.xlane.xlu0 %257
    %v259 = vadd.f32 %v241, %v242
    %v260 = vadd.f32 %v259, %v243
    %v261 = vadd.f32 %v260, %v244
    %262 = vadd.xlane.f32.xlu0 %v261
    %v263 = vpop.xlane.xlu0 %262
    %v264 = vadd.f32 %v245, %v246
    %v265 = vadd.f32 %v264, %v247
    %v266 = vadd.f32 %v265, %v248
    %267 = vadd.xlane.f32.xlu0 %v266
    %v268 = vpop.xlane.xlu0 %267
    %v269 = vmul.f32 %v253, 0.002232143
    %v270 = vmul.f32 %v258, 0.002232143
    %v271 = vmul.f32 %v263, 0.002232143
    %v272 = vmul.f32 %v268, 0.002232143
    %v273 = vadd.f32 %v269, 1e-05
    %v274 = vadd.f32 %v270, 1e-05
    %v275 = vadd.f32 %v271, 1e-05
    %v276 = vadd.f32 %v272, 1e-05
    %v277 = vrsqrt.pop %v273
    %v278 = vrsqrt.pop %v274
    %v279 = vrsqrt.pop %v275
    %v280 = vrsqrt.pop %v276
    %v281 = vmul.f32 %v217, %v277
    %v282 = vmul.f32 %v218, %v277
    %v283 = vmul.f32 %v219, %v277
    %v284 = vmul.f32 %v220, %v277
    %v285 = vmul.f32 %v221, %v278
    %v286 = vmul.f32 %v222, %v278
    %v287 = vmul.f32 %v223, %v278
    %v288 = vmul.f32 %v224, %v278
    %v289 = vmul.f32 %v225, %v279
    %v290 = vmul.f32 %v226, %v279
    %v291 = vmul.f32 %v227, %v279
    %v292 = vmul.f32 %v228, %v279
    %v293 = vmul.f32 %v229, %v280
    %v294 = vmul.f32 %v230, %v280
    %v295 = vmul.f32 %v231, %v280
    %v296 = vmul.f32 %v232, %v280
    %v298 = vlaneseq
    %v299 = vshrl.u32 %v298, 7
    %v300 = vsub.s32 0, %v299
    %v301 = vrot.slane %v166, %v300
    %v302 = vlaneseq
    %v303 = vshrl.u32 %v302, 7
    %v304 = vsub.s32 1, %v303
    %v305 = vrot.slane %v166, %v304
    %v306 = vlaneseq
    %v307 = vshrl.u32 %v306, 7
    %v308 = vsub.s32 2, %v307
    %v309 = vrot.slane %v166, %v308
    %v310 = vlaneseq
    %v311 = vshrl.u32 %v310, 7
    %v312 = vsub.s32 3, %v311
    %v313 = vrot.slane %v166, %v312
    %v318 = vmul.f32 %v281, %v301
    %v319 = vmul.f32 %v282, %v305
    %v320 = vmul.f32 %v283, %v309
    %v321 = vmul.f32 %v284, %v313
    %v322 = vmul.f32 %v285, %v301
    %v323 = vmul.f32 %v286, %v305
    %v324 = vmul.f32 %v287, %v309
    %v325 = vmul.f32 %v288, %v313
    %v326 = vmul.f32 %v289, %v301
    %v327 = vmul.f32 %v290, %v305
    %v328 = vmul.f32 %v291, %v309
    %v329 = vmul.f32 %v292, %v313
    %v330 = vmul.f32 %v293, %v301
    %v331 = vmul.f32 %v294, %v305
    %v332 = vmul.f32 %v295, %v309
    %v333 = vmul.f32 %v296, %v313
    %v335 = vlaneseq
    %v336 = vshrl.u32 %v335, 7
    %v337 = vsub.s32 0, %v336
    %v338 = vrot.slane %v167, %v337
    %v339 = vlaneseq
    %v340 = vshrl.u32 %v339, 7
    %v341 = vsub.s32 1, %v340
    %v342 = vrot.slane %v167, %v341
    %v343 = vlaneseq
    %v344 = vshrl.u32 %v343, 7
    %v345 = vsub.s32 2, %v344
    %v346 = vrot.slane %v167, %v345
    %v347 = vlaneseq
    %v348 = vshrl.u32 %v347, 7
    %v349 = vsub.s32 3, %v348
    %v350 = vrot.slane %v167, %v349
    %v355 = vadd.f32 %v318, %v338
    %v356 = vadd.f32 %v319, %v342
    %v357 = vadd.f32 %v320, %v346
    %v358 = vadd.f32 %v321, %v350
    %v359 = vadd.f32 %v322, %v338
    %v360 = vadd.f32 %v323, %v342
    %v361 = vadd.f32 %v324, %v346
    %v362 = vadd.f32 %v325, %v350
    %v363 = vadd.f32 %v326, %v338
    %v364 = vadd.f32 %v327, %v342
    %v365 = vadd.f32 %v328, %v346
    %v366 = vadd.f32 %v329, %v350
    %v367 = vadd.f32 %v330, %v338
    %v368 = vadd.f32 %v331, %v342
    %v369 = vadd.f32 %v332, %v346
    %v370 = vadd.f32 %v333, %v350
    %v371 = vpack.c.bf16 %v359, %v355
    %v372 = vpack.c.bf16 %v360, %v356
    %v373 = vpack.c.bf16 %v361, %v357
    %v374 = vpack.c.bf16 %v362, %v358
    %v375 = vpack.c.bf16 %v367, %v363
    %v376 = vpack.c.bf16 %v368, %v364
    %v377 = vpack.c.bf16 %v369, %v365
    %v378 = vpack.c.bf16 %v370, %v366
    %v379 = vld [vmem:[#allocation5] sm:$0xf]
    %v380 = vld [vmem:[#allocation5 + $0x4] sm:$0xf]
    %v381 = vld [vmem:[#allocation5 + $0x8] sm:$0xf]
    %v382 = vld [vmem:[#allocation5 + $0xc] sm:$0xf]
    %v383 = vld [vmem:[#allocation5 + $0x10] sm:$0xf]
    %v384 = vld [vmem:[#allocation5 + $0x14] sm:$0xf]
    %v385 = vld [vmem:[#allocation5 + $0x18] sm:$0xf]
    %v386 = vld [vmem:[#allocation5 + $0x1c] sm:$0xf]
    %v387 = vld [vmem:[#allocation5 + $0x20] sm:$0xf]
    %v388 = vld [vmem:[#allocation5 + $0x24] sm:$0xf]
    %v389 = vld [vmem:[#allocation5 + $0x28] sm:$0xf]
    %v390 = vld [vmem:[#allocation5 + $0x2c] sm:$0xf]
    %v391 = vld [vmem:[#allocation5 + $0x30] sm:$0xf]
    %v392 = vld [vmem:[#allocation5 + $0x34] sm:$0xf]
    %v393 = vld [vmem:[#allocation5 + $0x38] sm:$0xf]
    %v394 = vld [vmem:[#allocation5 + $0x3c] sm:$0xf]
    %v395 = vld [vmem:[#allocation5 + $0x40] sm:$0xf]
    %v396 = vld [vmem:[#allocation5 + $0x44] sm:$0xf]
    %v397 = vld [vmem:[#allocation5 + $0x48] sm:$0xf]
    %v398 = vld [vmem:[#allocation5 + $0x4c] sm:$0xf]
    %v399 = vld [vmem:[#allocation5 + $0x50] sm:$0xf]
    %v400 = vld [vmem:[#allocation5 + $0x54] sm:$0xf]
    %v401 = vld [vmem:[#allocation5 + $0x58] sm:$0xf]
    %v402 = vld [vmem:[#allocation5 + $0x5c] sm:$0xf]
    %v403 = vld [vmem:[#allocation5 + $0x60] sm:$0xf]
    %v404 = vld [vmem:[#allocation5 + $0x64] sm:$0xf]
    %v405 = vld [vmem:[#allocation5 + $0x68] sm:$0xf]
    %v406 = vld [vmem:[#allocation5 + $0x6c] sm:$0xf]
    %v407 = vld [vmem:[#allocation5 + $0x70] sm:$0xf]
    %v408 = vld [vmem:[#allocation5 + $0x74] sm:$0xf]
    %v409 = vld [vmem:[#allocation5 + $0x78] sm:$0xf]
    %v410 = vld [vmem:[#allocation5 + $0x7c] sm:$0xf]
    %v411 = vld [vmem:[#allocation5 + $0x80] sm:$0xf]
    %v412 = vld [vmem:[#allocation5 + $0x84] sm:$0xf]
    %v413 = vld [vmem:[#allocation5 + $0x88] sm:$0xf]
    %v414 = vld [vmem:[#allocation5 + $0x8c] sm:$0xf]
    %v415 = vld [vmem:[#allocation5 + $0x90] sm:$0xf]
    %v416 = vld [vmem:[#allocation5 + $0x94] sm:$0xf]
    %v417 = vld [vmem:[#allocation5 + $0x98] sm:$0xf]
    %v418 = vld [vmem:[#allocation5 + $0x9c] sm:$0xf]
    %v419 = vld [vmem:[#allocation5 + $0xa0] sm:$0xf]
    %v420 = vld [vmem:[#allocation5 + $0xa4] sm:$0xf]
    %v421 = vld [vmem:[#allocation5 + $0xa8] sm:$0xf]
    %v422 = vld [vmem:[#allocation5 + $0xac] sm:$0xf]
    %v423 = vld [vmem:[#allocation5 + $0xb0] sm:$0xf]
    %v424 = vld [vmem:[#allocation5 + $0xb4] sm:$0xf]
    %v425 = vld [vmem:[#allocation5 + $0xb8] sm:$0xf]
    %v426 = vld [vmem:[#allocation5 + $0xbc] sm:$0xf]
    %v427 = vld [vmem:[#allocation5 + $0xc0] sm:$0xf]
    %v428 = vld [vmem:[#allocation5 + $0xc4] sm:$0xf]
    %v429 = vld [vmem:[#allocation5 + $0xc8] sm:$0xf]
    %v430 = vld [vmem:[#allocation5 + $0xcc] sm:$0xf]
    %v431 = vld [vmem:[#allocation5 + $0xd0] sm:$0xf]
    %v432 = vld [vmem:[#allocation5 + $0xd4] sm:$0xf]
    %v433 = vld [vmem:[#allocation5 + $0xd8] sm:$0xf]
    %v434 = vld [vmem:[#allocation5 + $0xdc] sm:$0xf]
    %v435 = vld [vmem:[#allocation5 + $0xe0] sm:$0xf]
    %v436 = vld [vmem:[#allocation5 + $0xe4] sm:$0xf]
    %v437 = vld [vmem:[#allocation5 + $0xe8] sm:$0xf]
    %v438 = vld [vmem:[#allocation5 + $0xec] sm:$0xf]
    %v439 = vld [vmem:[#allocation5 + $0xf0] sm:$0xf]
    %v440 = vld [vmem:[#allocation5 + $0xf4] sm:$0xf]
    %v441 = vld [vmem:[#allocation5 + $0xf8] sm:$0xf]
    %v442 = vld [vmem:[#allocation5 + $0xfc] sm:$0xf]
    %v443 = vld [vmem:[%s2 + $0xc] sm:$0x1]
    %v445 = vlaneseq
    %v446 = vshrl.u32 %v445, 7
    %v447 = vsub.s32 0, %v446
    %v448 = vrot.slane %v443, %v447
    %v514 = vunpack.c.l.b16 %v379
    %v515 = vunpack.c.l.b16 %v380
    %v516 = vunpack.c.l.b16 %v381
    %v517 = vunpack.c.l.b16 %v382
    %v518 = vunpack.c.l.b16 %v383
    %v519 = vunpack.c.l.b16 %v384
    %v520 = vunpack.c.l.b16 %v385
    %v521 = vunpack.c.l.b16 %v386
    %v522 = vunpack.c.l.b16 %v387
    %v523 = vunpack.c.l.b16 %v388
    %v524 = vunpack.c.l.b16 %v389
    %v525 = vunpack.c.l.b16 %v390
    %v526 = vunpack.c.l.b16 %v391
    %v527 = vunpack.c.l.b16 %v392
    %v528 = vunpack.c.l.b16 %v393
    %v529 = vunpack.c.l.b16 %v394
    %v530 = vunpack.c.l.b16 %v395
    %v531 = vunpack.c.l.b16 %v396
    %v532 = vunpack.c.l.b16 %v397
    %v533 = vunpack.c.l.b16 %v398
    %v534 = vunpack.c.l.b16 %v399
    %v535 = vunpack.c.l.b16 %v400
    %v536 = vunpack.c.l.b16 %v401
    %v537 = vunpack.c.l.b16 %v402
    %v538 = vunpack.c.l.b16 %v403
    %v539 = vunpack.c.l.b16 %v404
    %v540 = vunpack.c.l.b16 %v405
    %v541 = vunpack.c.l.b16 %v406
    %v542 = vunpack.c.l.b16 %v407
    %v543 = vunpack.c.l.b16 %v408
    %v544 = vunpack.c.l.b16 %v409
    %v545 = vunpack.c.l.b16 %v410
    %v546 = vunpack.c.l.b16 %v411
    %v547 = vunpack.c.l.b16 %v412
    %v548 = vunpack.c.l.b16 %v413
    %v549 = vunpack.c.l.b16 %v414
    %v550 = vunpack.c.l.b16 %v415
    %v551 = vunpack.c.l.b16 %v416
    %v552 = vunpack.c.l.b16 %v417
    %v553 = vunpack.c.l.b16 %v418
    %v554 = vunpack.c.l.b16 %v419
    %v555 = vunpack.c.l.b16 %v420
    %v556 = vunpack.c.l.b16 %v421
    %v557 = vunpack.c.l.b16 %v422
    %v558 = vunpack.c.l.b16 %v423
    %v559 = vunpack.c.l.b16 %v424
    %v560 = vunpack.c.l.b16 %v425
    %v561 = vunpack.c.l.b16 %v426
    %v562 = vunpack.c.l.b16 %v427
    %v563 = vunpack.c.l.b16 %v428
    %v564 = vunpack.c.l.b16 %v429
    %v565 = vunpack.c.l.b16 %v430
    %v566 = vunpack.c.l.b16 %v431
    %v567 = vunpack.c.l.b16 %v432
    %v568 = vunpack.c.l.b16 %v433
    %v569 = vunpack.c.l.b16 %v434
    %v570 = vunpack.c.l.b16 %v435
    %v571 = vunpack.c.l.b16 %v436
    %v572 = vunpack.c.l.b16 %v437
    %v573 = vunpack.c.l.b16 %v438
    %v574 = vunpack.c.l.b16 %v439
    %v575 = vunpack.c.l.b16 %v440
    %v576 = vunpack.c.l.b16 %v441
    %v577 = vunpack.c.l.b16 %v442
    %v578 = vpack.c.b16 %v515, %v514
    %v579 = vpack.c.b16 %v517, %v516
    %v580 = vpack.c.b16 %v519, %v518
    %v581 = vpack.c.b16 %v521, %v520
    %v582 = vpack.c.b16 %v523, %v522
    %v583 = vpack.c.b16 %v525, %v524
    %v584 = vpack.c.b16 %v527, %v526
    %v585 = vpack.c.b16 %v529, %v528
    %v586 = vpack.c.b16 %v531, %v530
    %v587 = vpack.c.b16 %v533, %v532
    %v588 = vpack.c.b16 %v535, %v534
    %v589 = vpack.c.b16 %v537, %v536
    %v590 = vpack.c.b16 %v539, %v538
    %v591 = vpack.c.b16 %v541, %v540
    %v592 = vpack.c.b16 %v543, %v542
    %v593 = vpack.c.b16 %v545, %v544
    %v594 = vpack.c.b16 %v547, %v546
    %v595 = vpack.c.b16 %v549, %v548
    %v596 = vpack.c.b16 %v551, %v550
    %v597 = vpack.c.b16 %v553, %v552
    %v598 = vpack.c.b16 %v555, %v554
    %v599 = vpack.c.b16 %v557, %v556
    %v600 = vpack.c.b16 %v559, %v558
    %v601 = vpack.c.b16 %v561, %v560
    %v602 = vpack.c.b16 %v563, %v562
    %v603 = vpack.c.b16 %v565, %v564
    %v604 = vpack.c.b16 %v567, %v566
    %v605 = vpack.c.b16 %v569, %v568
    %v606 = vpack.c.b16 %v571, %v570
    %v607 = vpack.c.b16 %v573, %v572
    %v608 = vpack.c.b16 %v575, %v574
    %v609 = vpack.c.b16 %v577, %v576
    %642 = vmatprep.subr.bf16.mxu0 0
    %643 = vmatpush1.bf16.msra.mxu0 %v578
    %644 = vmatprep.subr.bf16.mxu0 0
    %645 = vmatpush1.bf16.msra.mxu0 %v579
    %646 = vmatprep.subr.bf16.mxu0 0
    %647 = vmatpush1.bf16.msra.mxu0 %v580
    %648 = vmatprep.subr.bf16.mxu0 0
    %649 = vmatpush1.bf16.msra.mxu0 %v581
    %650 = vmatprep.subr.bf16.mxu0 0
    %651 = vmatpush1.bf16.msra.mxu0 %v582
    %652 = vmatprep.subr.bf16.mxu0 0
    %653 = vmatpush1.bf16.msra.mxu0 %v583
    %654 = vmatprep.subr.bf16.mxu0 0
    %655 = vmatpush1.bf16.msra.mxu0 %v584
    %656 = vmatprep.subr.bf16.mxu0 0
    %657 = vmatpush1.bf16.msra.mxu0 %v585
    %658 = vmatprep.subr.bf16.mxu0 0
    %659 = vmatpush1.bf16.msra.mxu0 %v586
    %660 = vmatprep.subr.bf16.mxu0 0
    %661 = vmatpush1.bf16.msra.mxu0 %v587
    %662 = vmatprep.subr.bf16.mxu0 0
    %663 = vmatpush1.bf16.msra.mxu0 %v588
    %664 = vmatprep.subr.bf16.mxu0 0
    %665 = vmatpush1.bf16.msra.mxu0 %v589
    %666 = vmatprep.subr.bf16.mxu0 0
    %667 = vmatpush1.bf16.msra.mxu0 %v590
    %668 = vmatprep.subr.bf16.mxu0 0
    %669 = vmatpush1.bf16.msra.mxu0 %v591
    %670 = vmatprep.subr.bf16.mxu0 0
    %671 = vmatpush1.bf16.msra.mxu0 %v592
    %672 = vmatprep.subr.bf16.mxu0 0
    %673 = vmatpush1.bf16.msra.mxu0 %v593
    %674 = vmatprep.mubr.bf16.mxu0 %v372
    %675 = vmatmul.mubr.bf16.gmra.mrb[0].mxu0 %v371
    %v676 = vpop.f32.mrb[0].mxu0
    %v677 = vadd.f32 %v448, %v676
    %v678 = vpop.f32.mrb[0].mxu0
    %v679 = vpop.f32.mrb[0].mxu0
    %v680 = vadd.f32 %v448, %v679
    %v681 = vpop.f32.mrb[0].mxu0
    %682 = vmatprep.mubr.bf16.mxu0 %v376
    %683 = vmatmul.mubr.bf16.gmra.mrb[0].mxu0 %v375
    %v684 = vpop.f32.mrb[0].mxu0
    %v685 = vadd.f32 %v448, %v684
    %v686 = vpop.f32.mrb[0].mxu0
    %v687 = vpop.f32.mrb[0].mxu0
    %v688 = vadd.f32 %v448, %v687
    %v689 = vpop.f32.mrb[0].mxu0
    %690 = vdwg.mxu0
    %691 = vmatprep.subr.bf16.mxu0 0
    %692 = vmatpush1.bf16.msra.mxu0 %v594
    %693 = vmatprep.subr.bf16.mxu0 0
    %694 = vmatpush1.bf16.msra.mxu0 %v595
    %695 = vmatprep.subr.bf16.mxu0 0
    %696 = vmatpush1.bf16.msra.mxu0 %v596
    %697 = vmatprep.subr.bf16.mxu0 0
    %698 = vmatpush1.bf16.msra.mxu0 %v597
    %699 = vmatprep.subr.bf16.mxu0 0
    %700 = vmatpush1.bf16.msra.mxu0 %v598
    %701 = vmatprep.subr.bf16.mxu0 0
    %702 = vmatpush1.bf16.msra.mxu0 %v599
    %703 = vmatprep.subr.bf16.mxu0 0
    %704 = vmatpush1.bf16.msra.mxu0 %v600
    %705 = vmatprep.subr.bf16.mxu0 0
    %706 = vmatpush1.bf16.msra.mxu0 %v601
    %707 = vmatprep.subr.bf16.mxu0 0
    %708 = vmatpush1.bf16.msra.mxu0 %v602
    %709 = vmatprep.subr.bf16.mxu0 0
    %710 = vmatpush1.bf16.msra.mxu0 %v603
    %711 = vmatprep.subr.bf16.mxu0 0
    %712 = vmatpush1.bf16.msra.mxu0 %v604
    %713 = vmatprep.subr.bf16.mxu0 0
    %714 = vmatpush1.bf16.msra.mxu0 %v605
    %715 = vmatprep.subr.bf16.mxu0 0
    %716 = vmatpush1.bf16.msra.mxu0 %v606
    %717 = vmatprep.subr.bf16.mxu0 0
    %718 = vmatpush1.bf16.msra.mxu0 %v607
    %719 = vmatprep.subr.bf16.mxu0 0
    %720 = vmatpush1.bf16.msra.mxu0 %v608
    %721 = vmatprep.subr.bf16.mxu0 0
    %722 = vmatpush1.bf16.msra.mxu0 %v609
    %723 = vmatprep.mubr.bf16.mxu0 %v374
    %724 = vmatmul.mubr.bf16.gmra.mrb[0].mxu0 %v373
    %v725 = vpop.f32.mrb[0].mxu0
    %v726 = vadd.f32 %v677, %v725
    %v727 = vpop.f32.mrb[0].mxu0
    %v728 = vpop.f32.mrb[0].mxu0
    %v729 = vadd.f32 %v680, %v728
    %v730 = vpop.f32.mrb[0].mxu0
    %731 = vmatprep.mubr.bf16.mxu0 %v378
    %732 = vmatmul.mubr.bf16.gmra.mrb[0].mxu0 %v377
    %v733 = vpop.f32.mrb[0].mxu0
    %v734 = vadd.f32 %v685, %v733
    %v735 = vpop.f32.mrb[0].mxu0
    %v736 = vpop.f32.mrb[0].mxu0
    %v737 = vadd.f32 %v688, %v736
    %v738 = vpop.f32.mrb[0].mxu0
    %739 = vdwg.mxu0
    %v740 = vld [vmem:[%s2 + $0x8] sm:$0x1]
    %742 = vset.pattern.permute.xlu0 0
    %743 = vperm.xlu0 %742, %v162
    %v744 = vpop.permute.xlu0 %743
    %747 = vset.pattern.permute.xlu0 0
    %748 = vperm.xlu0 %747, %v163
    %v749 = vpop.permute.xlu0 %748
    %752 = vset.pattern.permute.xlu0 0
    %753 = vperm.xlu0 %752, %v164
    %v754 = vpop.permute.xlu0 %753
    %757 = vset.pattern.permute.xlu0 0
    %758 = vperm.xlu0 %757, %v165
    %v759 = vpop.permute.xlu0 %758
    %v762 = vlaneseq
    %v763 = vshrl.u32 %v762, 7
    %v764 = vsub.s32 0, %v763
    %v765 = vrot.slane %v740, %v764
    %v767 = vmul.f32 %v744, %v765
    %v768 = vmul.f32 %v749, %v765
    %v769 = vmul.f32 %v754, %v765
    %v770 = vmul.f32 %v759, %v765
    %v771 = vld [vmem:[%s2 + $0x9] sm:$0x1]
    %v773 = vlaneseq
    %v774 = vshrl.u32 %v773, 7
    %v775 = vsub.s32 0, %v774
    %v776 = vrot.slane %v771, %v775
    %v778 = vadd.f32 %v767, %v776
    %v779 = vadd.f32 %v768, %v776
    %v780 = vadd.f32 %v769, %v776
    %v781 = vadd.f32 %v770, %v776
    %v782 = vxor.u32 %v778, 2147483648
    %v783 = vxor.u32 %v779, 2147483648
    %v784 = vxor.u32 %v780, 2147483648
    %v785 = vxor.u32 %v781, 2147483648
    %v786 = vmul.f32 %v782, 1.442695
    %v787 = vpow.pop %v786
    %v788 = vmul.f32 %v783, 1.442695
    %v789 = vpow.pop %v788
    %v790 = vmul.f32 %v784, 1.442695
    %v791 = vpow.pop %v790
    %v792 = vmul.f32 %v785, 1.442695
    %v793 = vpow.pop %v792
    %v794 = vadd.f32 %v787, 1.0
    %v795 = vadd.f32 %v789, 1.0
    %v796 = vadd.f32 %v791, 1.0
    %v797 = vadd.f32 %v793, 1.0
    %v798 = vrcp.pop %v794
    %v799 = vmul.f32 1.0, %v798
    %v800 = vrcp.pop %v795
    %v801 = vmul.f32 1.0, %v800
    %v802 = vrcp.pop %v796
    %v803 = vmul.f32 1.0, %v802
    %v804 = vrcp.pop %v797
    %v805 = vmul.f32 1.0, %v804
    %v806 = vmul.f32 %v778, %v799
    %v807 = vmul.f32 %v779, %v801
    %v808 = vmul.f32 %v780, %v803
    %v809 = vmul.f32 %v781, %v805
    %v810 = vpack.c.bf16 %v807, %v806
    %v811 = vpack.c.bf16 %v809, %v808
    %v812 = vld [vmem:[#allocation7] sm:$0xff]
    %v813 = vld [vmem:[#allocation7 + $0x8] sm:$0xff]
    %v814 = vld [vmem:[#allocation7 + $0x10] sm:$0xff]
    %v815 = vld [vmem:[#allocation7 + $0x18] sm:$0xff]
    %v816 = vld [vmem:[#allocation7 + $0x20] sm:$0xff]
    %v817 = vld [vmem:[#allocation7 + $0x28] sm:$0xff]
    %v818 = vld [vmem:[#allocation7 + $0x30] sm:$0xff]
    %v819 = vld [vmem:[#allocation7 + $0x38] sm:$0xff]
    %v820 = vld [vmem:[#allocation7 + $0x40] sm:$0xff]
    %v821 = vld [vmem:[#allocation7 + $0x48] sm:$0xff]
    %v822 = vld [vmem:[#allocation7 + $0x50] sm:$0xff]
    %v823 = vld [vmem:[#allocation7 + $0x58] sm:$0xff]
    %v824 = vld [vmem:[#allocation7 + $0x60] sm:$0xff]
    %v825 = vld [vmem:[#allocation7 + $0x68] sm:$0xff]
    %v826 = vld [vmem:[#allocation7 + $0x70] sm:$0xff]
    %v827 = vld [vmem:[#allocation7 + $0x78] sm:$0xff]
    %v828 = vld [vmem:[%s2 + $0xa] sm:$0x3]
    %v830 = vlaneseq
    %v831 = vshrl.u32 %v830, 7
    %v832 = vsub.s32 0, %v831
    %v833 = vrot.slane %v828, %v832
    %v834 = vlaneseq
    %v835 = vshrl.u32 %v834, 7
    %v836 = vsub.s32 1, %v835
    %v837 = vrot.slane %v828, %v836
    %v856 = vunpack.c.l.b16 %v812
    %v857 = vunpack.c.h.b16 %v812
    %v858 = vunpack.c.l.b16 %v813
    %v859 = vunpack.c.h.b16 %v813
    %v860 = vunpack.c.l.b16 %v814
    %v861 = vunpack.c.h.b16 %v814
    %v862 = vunpack.c.l.b16 %v815
    %v863 = vunpack.c.h.b16 %v815
    %v864 = vunpack.c.l.b16 %v816
    %v865 = vunpack.c.h.b16 %v816
    %v866 = vunpack.c.l.b16 %v817
    %v867 = vunpack.c.h.b16 %v817
    %v868 = vunpack.c.l.b16 %v818
    %v869 = vunpack.c.h.b16 %v818
    %v870 = vunpack.c.l.b16 %v819
    %v871 = vunpack.c.h.b16 %v819
    %v872 = vunpack.c.l.b16 %v820
    %v873 = vunpack.c.h.b16 %v820
    %v874 = vunpack.c.l.b16 %v821
    %v875 = vunpack.c.h.b16 %v821
    %v876 = vunpack.c.l.b16 %v822
    %v877 = vunpack.c.h.b16 %v822
    %v878 = vunpack.c.l.b16 %v823
    %v879 = vunpack.c.h.b16 %v823
    %v880 = vunpack.c.l.b16 %v824
    %v881 = vunpack.c.h.b16 %v824
    %v882 = vunpack.c.l.b16 %v825
    %v883 = vunpack.c.h.b16 %v825
    %v884 = vunpack.c.l.b16 %v826
    %v885 = vunpack.c.h.b16 %v826
    %v886 = vunpack.c.l.b16 %v827
    %v887 = vunpack.c.h.b16 %v827
    %v888 = vpack.c.b16 %v858, %v856
    %v889 = vpack.c.b16 %v859, %v857
    %v890 = vpack.c.b16 %v862, %v860
    %v891 = vpack.c.b16 %v863, %v861
    %v892 = vpack.c.b16 %v866, %v864
    %v893 = vpack.c.b16 %v867, %v865
    %v894 = vpack.c.b16 %v870, %v868
    %v895 = vpack.c.b16 %v871, %v869
    %v896 = vpack.c.b16 %v874, %v872
    %v897 = vpack.c.b16 %v875, %v873
    %v898 = vpack.c.b16 %v878, %v876
    %v899 = vpack.c.b16 %v879, %v877
    %v900 = vpack.c.b16 %v882, %v880
    %v901 = vpack.c.b16 %v883, %v881
    %v902 = vpack.c.b16 %v886, %v884
    %v903 = vpack.c.b16 %v887, %v885
    %920 = vmatprep.subr.bf16.mxu0 %v889
    %921 = vmatpush1.bf16.msra.mxu0 %v888
    %922 = vmatprep.subr.bf16.mxu0 %v891
    %923 = vmatpush1.bf16.msra.mxu0 %v890
    %924 = vmatprep.subr.bf16.mxu0 %v893
    %925 = vmatpush1.bf16.msra.mxu0 %v892
    %926 = vmatprep.subr.bf16.mxu0 %v895
    %927 = vmatpush1.bf16.msra.mxu0 %v894
    %928 = vmatprep.subr.bf16.mxu0 %v897
    %929 = vmatpush1.bf16.msra.mxu0 %v896
    %930 = vmatprep.subr.bf16.mxu0 %v899
    %931 = vmatpush1.bf16.msra.mxu0 %v898
    %932 = vmatprep.subr.bf16.mxu0 %v901
    %933 = vmatpush1.bf16.msra.mxu0 %v900
    %934 = vmatprep.subr.bf16.mxu0 %v903
    %935 = vmatpush1.bf16.msra.mxu0 %v902
    %936 = vmatprep.subr.bf16.mxu0 0
    %937 = vmatpush1.bf16.msra.mxu0 0
    %938 = vmatprep.subr.bf16.mxu0 0
    %939 = vmatpush1.bf16.msra.mxu0 0
    %940 = vmatprep.subr.bf16.mxu0 0
    %941 = vmatpush1.bf16.msra.mxu0 0
    %942 = vmatprep.subr.bf16.mxu0 0
    %943 = vmatpush1.bf16.msra.mxu0 0
    %944 = vmatprep.subr.bf16.mxu0 0
    %945 = vmatpush1.bf16.msra.mxu0 0
    %946 = vmatprep.subr.bf16.mxu0 0
    %947 = vmatpush1.bf16.msra.mxu0 0
    %948 = vmatprep.subr.bf16.mxu0 0
    %949 = vmatpush1.bf16.msra.mxu0 0
    %950 = vmatprep.subr.bf16.mxu0 0
    %951 = vmatpush1.bf16.msra.mxu0 0
    %952 = vmatprep.mubr.bf16.mxu0 0
    %953 = vmatmul.mubr.bf16.gmra.mrb[0].mxu0 %v810
    %v954 = vpop.f32.mrb[0].mxu0
    %v955 = vadd.f32 %v833, %v954
    %v956 = vpop.f32.mrb[0].mxu0
    %v957 = vadd.f32 %v837, %v956
    %v958 = vpop.f32.mrb[0].mxu0
    %v959 = vadd.f32 %v833, %v958
    %v960 = vpop.f32.mrb[0].mxu0
    %v961 = vadd.f32 %v837, %v960
    %962 = vmatprep.mubr.bf16.mxu0 0
    %963 = vmatmul.mubr.bf16.gmra.mrb[0].mxu0 %v811
    %v964 = vpop.f32.mrb[0].mxu0
    %v965 = vadd.f32 %v833, %v964
    %v966 = vpop.f32.mrb[0].mxu0
    %v967 = vadd.f32 %v837, %v966
    %v968 = vpop.f32.mrb[0].mxu0
    %v969 = vadd.f32 %v833, %v968
    %v970 = vpop.f32.mrb[0].mxu0
    %v971 = vadd.f32 %v837, %v970
    %972 = vdwg.mxu0
    %v973 = vpack.c.bf16 %v729, %v726
    %v974 = vpack.c.bf16 %v737, %v734
    %v975 = vld [vmem:[#allocation8] sm:$0xff]
    %v976 = vld [vmem:[#allocation8 + $0x8] sm:$0xff]
    %v977 = vld [vmem:[#allocation8 + $0x10] sm:$0xff]
    %v978 = vld [vmem:[#allocation8 + $0x18] sm:$0xff]
    %v979 = vld [vmem:[#allocation8 + $0x20] sm:$0xff]
    %v980 = vld [vmem:[#allocation8 + $0x28] sm:$0xff]
    %v981 = vld [vmem:[#allocation8 + $0x30] sm:$0xff]
    %v982 = vld [vmem:[#allocation8 + $0x38] sm:$0xff]
    %v983 = vld [vmem:[#allocation8 + $0x40] sm:$0xff]
    %v984 = vld [vmem:[#allocation8 + $0x48] sm:$0xff]
    %v985 = vld [vmem:[#allocation8 + $0x50] sm:$0xff]
    %v986 = vld [vmem:[#allocation8 + $0x58] sm:$0xff]
    %v987 = vld [vmem:[#allocation8 + $0x60] sm:$0xff]
    %v988 = vld [vmem:[#allocation8 + $0x68] sm:$0xff]
    %v989 = vld [vmem:[#allocation8 + $0x70] sm:$0xff]
    %v990 = vld [vmem:[#allocation8 + $0x78] sm:$0xff]
    %v991 = vpack.c.bf16 %v959, %v955
    %v992 = vpack.c.bf16 %v961, %v957
    %v993 = vpack.c.bf16 %v969, %v965
    %v994 = vpack.c.bf16 %v971, %v967
    %v995 = vld [vmem:[#allocation10] sm:$0xff]
    %v996 = vld [vmem:[#allocation10 + $0x8] sm:$0xff]
    %v997 = vld [vmem:[#allocation10 + $0x10] sm:$0xff]
    %v998 = vld [vmem:[#allocation10 + $0x18] sm:$0xff]
    %v999 = vld [vmem:[#allocation10 + $0x20] sm:$0xff]
    %v1000 = vld [vmem:[#allocation10 + $0x28] sm:$0xff]
    %v1001 = vld [vmem:[#allocation10 + $0x30] sm:$0xff]
    %v1002 = vld [vmem:[#allocation10 + $0x38] sm:$0xff]
    %v1003 = vld [vmem:[#allocation10 + $0x40] sm:$0xff]
    %v1004 = vld [vmem:[#allocation10 + $0x48] sm:$0xff]
    %v1005 = vld [vmem:[#allocation10 + $0x50] sm:$0xff]
    %v1006 = vld [vmem:[#allocation10 + $0x58] sm:$0xff]
    %v1007 = vld [vmem:[#allocation10 + $0x60] sm:$0xff]
    %v1008 = vld [vmem:[#allocation10 + $0x68] sm:$0xff]
    %v1009 = vld [vmem:[#allocation10 + $0x70] sm:$0xff]
    %v1010 = vld [vmem:[#allocation10 + $0x78] sm:$0xff]
    %v1011 = vld [vmem:[#allocation10 + $0x80] sm:$0xff]
    %v1012 = vld [vmem:[#allocation10 + $0x88] sm:$0xff]
    %v1013 = vld [vmem:[#allocation10 + $0x90] sm:$0xff]
    %v1014 = vld [vmem:[#allocation10 + $0x98] sm:$0xff]
    %v1015 = vld [vmem:[#allocation10 + $0xa0] sm:$0xff]
    %v1016 = vld [vmem:[#allocation10 + $0xa8] sm:$0xff]
    %v1017 = vld [vmem:[#allocation10 + $0xb0] sm:$0xff]
    %v1018 = vld [vmem:[#allocation10 + $0xb8] sm:$0xff]
    %v1019 = vld [vmem:[#allocation10 + $0xc0] sm:$0xff]
    %v1020 = vld [vmem:[#allocation10 + $0xc8] sm:$0xff]
    %v1021 = vld [vmem:[#allocation10 + $0xd0] sm:$0xff]
    %v1022 = vld [vmem:[#allocation10 + $0xd8] sm:$0xff]
    %v1023 = vld [vmem:[#allocation10 + $0xe0] sm:$0xff]
    %v1024 = vld [vmem:[#allocation10 + $0xe8] sm:$0xff]
    %v1025 = vld [vmem:[#allocation10 + $0xf0] sm:$0xff]
    %v1026 = vld [vmem:[#allocation10 + $0xf8] sm:$0xff]
    %v1059 = vunpack.c.l.b16 %v995
    %v1060 = vunpack.c.h.b16 %v995
    %v1061 = vunpack.c.l.b16 %v996
    %v1062 = vunpack.c.h.b16 %v996
    %v1063 = vunpack.c.l.b16 %v997
    %v1064 = vunpack.c.h.b16 %v997
    %v1065 = vunpack.c.l.b16 %v998
    %v1066 = vunpack.c.h.b16 %v998
    %v1067 = vunpack.c.l.b16 %v999
    %v1068 = vunpack.c.h.b16 %v999
    %v1069 = vunpack.c.l.b16 %v1000
    %v1070 = vunpack.c.h.b16 %v1000
    %v1071 = vunpack.c.l.b16 %v1001
    %v1072 = vunpack.c.h.b16 %v1001
    %v1073 = vunpack.c.l.b16 %v1002
    %v1074 = vunpack.c.h.b16 %v1002
    %v1075 = vunpack.c.l.b16 %v1003
    %v1076 = vunpack.c.h.b16 %v1003
    %v1077 = vunpack.c.l.b16 %v1004
    %v1078 = vunpack.c.h.b16 %v1004
    %v1079 = vunpack.c.l.b16 %v1005
    %v1080 = vunpack.c.h.b16 %v1005
    %v1081 = vunpack.c.l.b16 %v1006
    %v1082 = vunpack.c.h.b16 %v1006
    %v1083 = vunpack.c.l.b16 %v1007
    %v1084 = vunpack.c.h.b16 %v1007
    %v1085 = vunpack.c.l.b16 %v1008
    %v1086 = vunpack.c.h.b16 %v1008
    %v1087 = vunpack.c.l.b16 %v1009
    %v1088 = vunpack.c.h.b16 %v1009
    %v1089 = vunpack.c.l.b16 %v1010
    %v1090 = vunpack.c.h.b16 %v1010
    %v1091 = vunpack.c.l.b16 %v1011
    %v1092 = vunpack.c.h.b16 %v1011
    %v1093 = vunpack.c.l.b16 %v1012
    %v1094 = vunpack.c.h.b16 %v1012
    %v1095 = vunpack.c.l.b16 %v1013
    %v1096 = vunpack.c.h.b16 %v1013
    %v1097 = vunpack.c.l.b16 %v1014
    %v1098 = vunpack.c.h.b16 %v1014
    %v1099 = vunpack.c.l.b16 %v1015
    %v1100 = vunpack.c.h.b16 %v1015
    %v1101 = vunpack.c.l.b16 %v1016
    %v1102 = vunpack.c.h.b16 %v1016
    %v1103 = vunpack.c.l.b16 %v1017
    %v1104 = vunpack.c.h.b16 %v1017
    %v1105 = vunpack.c.l.b16 %v1018
    %v1106 = vunpack.c.h.b16 %v1018
    %v1107 = vunpack.c.l.b16 %v1019
    %v1108 = vunpack.c.h.b16 %v1019
    %v1109 = vunpack.c.l.b16 %v1020
    %v1110 = vunpack.c.h.b16 %v1020
    %v1111 = vunpack.c.l.b16 %v1021
    %v1112 = vunpack.c.h.b16 %v1021
    %v1113 = vunpack.c.l.b16 %v1022
    %v1114 = vunpack.c.h.b16 %v1022
    %v1115 = vunpack.c.l.b16 %v1023
    %v1116 = vunpack.c.h.b16 %v1023
    %v1117 = vunpack.c.l.b16 %v1024
    %v1118 = vunpack.c.h.b16 %v1024
    %v1119 = vunpack.c.l.b16 %v1025
    %v1120 = vunpack.c.h.b16 %v1025
    %v1121 = vunpack.c.l.b16 %v1026
    %v1122 = vunpack.c.h.b16 %v1026
    %v1123 = vpack.c.b16 %v1061, %v1059
    %v1124 = vpack.c.b16 %v1062, %v1060
    %v1125 = vpack.c.b16 %v1065, %v1063
    %v1126 = vpack.c.b16 %v1066, %v1064
    %v1127 = vpack.c.b16 %v1069, %v1067
    %v1128 = vpack.c.b16 %v1070, %v1068
    %v1129 = vpack.c.b16 %v1073, %v1071
    %v1130 = vpack.c.b16 %v1074, %v1072
    %v1131 = vpack.c.b16 %v1077, %v1075
    %v1132 = vpack.c.b16 %v1078, %v1076
    %v1133 = vpack.c.b16 %v1081, %v1079
    %v1134 = vpack.c.b16 %v1082, %v1080
    %v1135 = vpack.c.b16 %v1085, %v1083
    %v1136 = vpack.c.b16 %v1086, %v1084
    %v1137 = vpack.c.b16 %v1089, %v1087
    %v1138 = vpack.c.b16 %v1090, %v1088
    %v1139 = vpack.c.b16 %v1093, %v1091
    %v1140 = vpack.c.b16 %v1094, %v1092
    %v1141 = vpack.c.b16 %v1097, %v1095
    %v1142 = vpack.c.b16 %v1098, %v1096
    %v1143 = vpack.c.b16 %v1101, %v1099
    %v1144 = vpack.c.b16 %v1102, %v1100
    %v1145 = vpack.c.b16 %v1105, %v1103
    %v1146 = vpack.c.b16 %v1106, %v1104
    %v1147 = vpack.c.b16 %v1109, %v1107
    %v1148 = vpack.c.b16 %v1110, %v1108
    %v1149 = vpack.c.b16 %v1113, %v1111
    %v1150 = vpack.c.b16 %v1114, %v1112
    %v1151 = vpack.c.b16 %v1117, %v1115
    %v1152 = vpack.c.b16 %v1118, %v1116
    %v1153 = vpack.c.b16 %v1121, %v1119
    %v1154 = vpack.c.b16 %v1122, %v1120
    %1187 = vmatprep.subr.bf16.mxu0 %v1124
    %1188 = vmatpush1.bf16.msra.mxu0 %v1123
    %1189 = vmatprep.subr.bf16.mxu0 %v1126
    %1190 = vmatpush1.bf16.msra.mxu0 %v1125
    %1191 = vmatprep.subr.bf16.mxu0 %v1128
    %1192 = vmatpush1.bf16.msra.mxu0 %v1127
    %1193 = vmatprep.subr.bf16.mxu0 %v1130
    %1194 = vmatpush1.bf16.msra.mxu0 %v1129
    %1195 = vmatprep.subr.bf16.mxu0 %v1132
    %1196 = vmatpush1.bf16.msra.mxu0 %v1131
    %1197 = vmatprep.subr.bf16.mxu0 %v1134
    %1198 = vmatpush1.bf16.msra.mxu0 %v1133
    %1199 = vmatprep.subr.bf16.mxu0 %v1136
    %1200 = vmatpush1.bf16.msra.mxu0 %v1135
    %1201 = vmatprep.subr.bf16.mxu0 %v1138
    %1202 = vmatpush1.bf16.msra.mxu0 %v1137
    %1203 = vmatprep.subr.bf16.mxu0 %v1140
    %1204 = vmatpush1.bf16.msra.mxu0 %v1139
    %1205 = vmatprep.subr.bf16.mxu0 %v1142
    %1206 = vmatpush1.bf16.msra.mxu0 %v1141
    %1207 = vmatprep.subr.bf16.mxu0 %v1144
    %1208 = vmatpush1.bf16.msra.mxu0 %v1143
    %1209 = vmatprep.subr.bf16.mxu0 %v1146
    %1210 = vmatpush1.bf16.msra.mxu0 %v1145
    %1211 = vmatprep.subr.bf16.mxu0 %v1148
    %1212 = vmatpush1.bf16.msra.mxu0 %v1147
    %1213 = vmatprep.subr.bf16.mxu0 %v1150
    %1214 = vmatpush1.bf16.msra.mxu0 %v1149
    %1215 = vmatprep.subr.bf16.mxu0 %v1152
    %1216 = vmatpush1.bf16.msra.mxu0 %v1151
    %1217 = vmatprep.subr.bf16.mxu0 %v1154
    %1218 = vmatpush1.bf16.msra.mxu0 %v1153
    %1219 = vmatprep.mubr.bf16.mxu0 %v992
    %1220 = vmatmul.mubr.bf16.gmra.mrb[0].mxu0 %v991
    %v1221 = vpop.f32.mrb[0].mxu0
    %v1222 = vadd.f32 0.0, %v1221
    %v1223 = vpop.f32.mrb[0].mxu0
    %v1224 = vadd.f32 0.0, %v1223
    %v1225 = vpop.f32.mrb[0].mxu0
    %v1226 = vadd.f32 0.0, %v1225
    %v1227 = vpop.f32.mrb[0].mxu0
    %v1228 = vadd.f32 0.0, %v1227
    %1229 = vmatprep.mubr.bf16.mxu0 %v994
    %1230 = vmatmul.mubr.bf16.gmra.mrb[0].mxu0 %v993
    %v1231 = vpop.f32.mrb[0].mxu0
    %v1232 = vadd.f32 0.0, %v1231
    %v1233 = vpop.f32.mrb[0].mxu0
    %v1234 = vadd.f32 0.0, %v1233
    %v1235 = vpop.f32.mrb[0].mxu0
    %v1236 = vadd.f32 0.0, %v1235
    %v1237 = vpop.f32.mrb[0].mxu0
    %v1238 = vadd.f32 0.0, %v1237
    %1239 = vdwg.mxu0
    %v1256 = vunpack.c.l.b16 %v975
    %v1257 = vunpack.c.h.b16 %v975
    %v1258 = vunpack.c.l.b16 %v976
    %v1259 = vunpack.c.h.b16 %v976
    %v1260 = vunpack.c.l.b16 %v977
    %v1261 = vunpack.c.h.b16 %v977
    %v1262 = vunpack.c.l.b16 %v978
    %v1263 = vunpack.c.h.b16 %v978
    %v1264 = vunpack.c.l.b16 %v979
    %v1265 = vunpack.c.h.b16 %v979
    %v1266 = vunpack.c.l.b16 %v980
    %v1267 = vunpack.c.h.b16 %v980
    %v1268 = vunpack.c.l.b16 %v981
    %v1269 = vunpack.c.h.b16 %v981
    %v1270 = vunpack.c.l.b16 %v982
    %v1271 = vunpack.c.h.b16 %v982
    %v1272 = vunpack.c.l.b16 %v983
    %v1273 = vunpack.c.h.b16 %v983
    %v1274 = vunpack.c.l.b16 %v984
    %v1275 = vunpack.c.h.b16 %v984
    %v1276 = vunpack.c.l.b16 %v985
    %v1277 = vunpack.c.h.b16 %v985
    %v1278 = vunpack.c.l.b16 %v986
    %v1279 = vunpack.c.h.b16 %v986
    %v1280 = vunpack.c.l.b16 %v987
    %v1281 = vunpack.c.h.b16 %v987
    %v1282 = vunpack.c.l.b16 %v988
    %v1283 = vunpack.c.h.b16 %v988
    %v1284 = vunpack.c.l.b16 %v989
    %v1285 = vunpack.c.h.b16 %v989
    %v1286 = vunpack.c.l.b16 %v990
    %v1287 = vunpack.c.h.b16 %v990
    %v1288 = vpack.c.b16 %v1258, %v1256
    %v1289 = vpack.c.b16 %v1259, %v1257
    %v1290 = vpack.c.b16 %v1262, %v1260
    %v1291 = vpack.c.b16 %v1263, %v1261
    %v1292 = vpack.c.b16 %v1266, %v1264
    %v1293 = vpack.c.b16 %v1267, %v1265
    %v1294 = vpack.c.b16 %v1270, %v1268
    %v1295 = vpack.c.b16 %v1271, %v1269
    %v1296 = vpack.c.b16 %v1274, %v1272
    %v1297 = vpack.c.b16 %v1275, %v1273
    %v1298 = vpack.c.b16 %v1278, %v1276
    %v1299 = vpack.c.b16 %v1279, %v1277
    %v1300 = vpack.c.b16 %v1282, %v1280
    %v1301 = vpack.c.b16 %v1283, %v1281
    %v1302 = vpack.c.b16 %v1286, %v1284
    %v1303 = vpack.c.b16 %v1287, %v1285
    %1320 = vmatprep.subr.bf16.mxu0 %v1289
    %1321 = vmatpush1.bf16.msra.mxu0 %v1288
    %1322 = vmatprep.subr.bf16.mxu0 %v1291
    %1323 = vmatpush1.bf16.msra.mxu0 %v1290
    %1324 = vmatprep.subr.bf16.mxu0 %v1293
    %1325 = vmatpush1.bf16.msra.mxu0 %v1292
    %1326 = vmatprep.subr.bf16.mxu0 %v1295
    %1327 = vmatpush1.bf16.msra.mxu0 %v1294
    %1328 = vmatprep.subr.bf16.mxu0 %v1297
    %1329 = vmatpush1.bf16.msra.mxu0 %v1296
    %1330 = vmatprep.subr.bf16.mxu0 %v1299
    %1331 = vmatpush1.bf16.msra.mxu0 %v1298
    %1332 = vmatprep.subr.bf16.mxu0 %v1301
    %1333 = vmatpush1.bf16.msra.mxu0 %v1300
    %1334 = vmatprep.subr.bf16.mxu0 %v1303
    %1335 = vmatpush1.bf16.msra.mxu0 %v1302
    %1336 = vmatprep.subr.bf16.mxu0 0
    %1337 = vmatpush1.bf16.msra.mxu0 0
    %1338 = vmatprep.subr.bf16.mxu0 0
    %1339 = vmatpush1.bf16.msra.mxu0 0
    %1340 = vmatprep.subr.bf16.mxu0 0
    %1341 = vmatpush1.bf16.msra.mxu0 0
    %1342 = vmatprep.subr.bf16.mxu0 0
    %1343 = vmatpush1.bf16.msra.mxu0 0
    %1344 = vmatprep.subr.bf16.mxu0 0
    %1345 = vmatpush1.bf16.msra.mxu0 0
    %1346 = vmatprep.subr.bf16.mxu0 0
    %1347 = vmatpush1.bf16.msra.mxu0 0
    %1348 = vmatprep.subr.bf16.mxu0 0
    %1349 = vmatpush1.bf16.msra.mxu0 0
    %1350 = vmatprep.subr.bf16.mxu0 0
    %1351 = vmatpush1.bf16.msra.mxu0 0
    %1352 = vmatprep.mubr.bf16.mxu0 0
    %1353 = vmatmul.mubr.bf16.gmra.mrb[0].mxu0 %v973
    %v1354 = vpop.f32.mrb[0].mxu0
    %v1355 = vadd.f32 %v1222, %v1354
    %v1356 = vpop.f32.mrb[0].mxu0
    %v1357 = vadd.f32 %v1224, %v1356
    %v1358 = vpop.f32.mrb[0].mxu0
    %v1359 = vadd.f32 %v1226, %v1358
    %v1360 = vpop.f32.mrb[0].mxu0
    %v1361 = vadd.f32 %v1228, %v1360
    %1362 = vmatprep.mubr.bf16.mxu0 0
    %1363 = vmatmul.mubr.bf16.gmra.mrb[0].mxu0 %v974
    %v1364 = vpop.f32.mrb[0].mxu0
    %v1365 = vadd.f32 %v1232, %v1364
    %v1366 = vpop.f32.mrb[0].mxu0
    %v1367 = vadd.f32 %v1234, %v1366
    %v1368 = vpop.f32.mrb[0].mxu0
    %v1369 = vadd.f32 %v1236, %v1368
    %v1370 = vpop.f32.mrb[0].mxu0
    %v1371 = vadd.f32 %v1238, %v1370
    %1372 = vdwg.mxu0
    %v1373 = vld [vmem:[%s2 + $0xd] sm:$0x3]
    %v1375 = vlaneseq
    %v1376 = vshrl.u32 %v1375, 7
    %v1377 = vsub.s32 0, %v1376
    %v1378 = vrot.slane %v1373, %v1377
    %v1379 = vlaneseq
    %v1380 = vshrl.u32 %v1379, 7
    %v1381 = vsub.s32 1, %v1380
    %v1382 = vrot.slane %v1373, %v1381
    %v1385 = vadd.f32 %v1355, %v1378
    %v1386 = vadd.f32 %v1357, %v1382
    %v1387 = vadd.f32 %v1359, %v1378
    %v1388 = vadd.f32 %v1361, %v1382
    %v1389 = vadd.f32 %v1365, %v1378
    %v1390 = vadd.f32 %v1367, %v1382
    %v1391 = vadd.f32 %v1369, %v1378
    %v1392 = vadd.f32 %v1371, %v1382
    %v1393 = vld [vmem:[%s2 + $0xf] sm:$0x3]
    %v1394 = vld [vmem:[%s2 + $0x11] sm:$0x3]
    %v1395 = vadd.f32 %v1385, %v1386
    %1396 = vadd.xlane.f32.xlu0 %v1395
    %v1397 = vpop.xlane.xlu0 %1396
    %v1398 = vadd.f32 %v1387, %v1388
    %1399 = vadd.xlane.f32.xlu0 %v1398
    %v1400 = vpop.xlane.xlu0 %1399
    %v1401 = vadd.f32 %v1389, %v1390
    %1402 = vadd.xlane.f32.xlu0 %v1401
    %v1403 = vpop.xlane.xlu0 %1402
    %v1404 = vadd.f32 %v1391, %v1392
    %1405 = vadd.xlane.f32.xlu0 %v1404
    %v1406 = vpop.xlane.xlu0 %1405
    %v1407 = vmul.f32 %v1397, 0.00390625
    %v1408 = vmul.f32 %v1400, 0.00390625
    %v1409 = vmul.f32 %v1403, 0.00390625
    %v1410 = vmul.f32 %v1406, 0.00390625
    %v1411 = vsub.f32 %v1385, %v1407
    %v1412 = vsub.f32 %v1386, %v1407
    %v1413 = vsub.f32 %v1387, %v1408
    %v1414 = vsub.f32 %v1388, %v1408
    %v1415 = vsub.f32 %v1389, %v1409
    %v1416 = vsub.f32 %v1390, %v1409
    %v1417 = vsub.f32 %v1391, %v1410
    %v1418 = vsub.f32 %v1392, %v1410
    %v1419 = vmul.f32 %v1411, %v1411
    %v1420 = vmul.f32 %v1412, %v1412
    %v1421 = vmul.f32 %v1413, %v1413
    %v1422 = vmul.f32 %v1414, %v1414
    %v1423 = vmul.f32 %v1415, %v1415
    %v1424 = vmul.f32 %v1416, %v1416
    %v1425 = vmul.f32 %v1417, %v1417
    %v1426 = vmul.f32 %v1418, %v1418
    %v1427 = vadd.f32 %v1419, %v1420
    %1428 = vadd.xlane.f32.xlu0 %v1427
    %v1429 = vpop.xlane.xlu0 %1428
    %v1430 = vadd.f32 %v1421, %v1422
    %1431 = vadd.xlane.f32.xlu0 %v1430
    %v1432 = vpop.xlane.xlu0 %1431
    %v1433 = vadd.f32 %v1423, %v1424
    %1434 = vadd.xlane.f32.xlu0 %v1433
    %v1435 = vpop.xlane.xlu0 %1434
    %v1436 = vadd.f32 %v1425, %v1426
    %1437 = vadd.xlane.f32.xlu0 %v1436
    %v1438 = vpop.xlane.xlu0 %1437
    %v1439 = vmul.f32 %v1429, 0.00390625
    %v1440 = vmul.f32 %v1432, 0.00390625
    %v1441 = vmul.f32 %v1435, 0.00390625
    %v1442 = vmul.f32 %v1438, 0.00390625
    %v1443 = vadd.f32 %v1439, 1e-05
    %v1444 = vadd.f32 %v1440, 1e-05
    %v1445 = vadd.f32 %v1441, 1e-05
    %v1446 = vadd.f32 %v1442, 1e-05
    %v1447 = vrsqrt.pop %v1443
    %v1448 = vrsqrt.pop %v1444
    %v1449 = vrsqrt.pop %v1445
    %v1450 = vrsqrt.pop %v1446
    %v1451 = vmul.f32 %v1411, %v1447
    %v1452 = vmul.f32 %v1412, %v1447
    %v1453 = vmul.f32 %v1413, %v1448
    %v1454 = vmul.f32 %v1414, %v1448
    %v1455 = vmul.f32 %v1415, %v1449
    %v1456 = vmul.f32 %v1416, %v1449
    %v1457 = vmul.f32 %v1417, %v1450
    %v1458 = vmul.f32 %v1418, %v1450
    %v1460 = vlaneseq
    %v1461 = vshrl.u32 %v1460, 7
    %v1462 = vsub.s32 0, %v1461
    %v1463 = vrot.slane %v1393, %v1462
    %v1464 = vlaneseq
    %v1465 = vshrl.u32 %v1464, 7
    %v1466 = vsub.s32 1, %v1465
    %v1467 = vrot.slane %v1393, %v1466
    %v1470 = vmul.f32 %v1451, %v1463
    %v1471 = vmul.f32 %v1452, %v1467
    %v1472 = vmul.f32 %v1453, %v1463
    %v1473 = vmul.f32 %v1454, %v1467
    %v1474 = vmul.f32 %v1455, %v1463
    %v1475 = vmul.f32 %v1456, %v1467
    %v1476 = vmul.f32 %v1457, %v1463
    %v1477 = vmul.f32 %v1458, %v1467
    %v1479 = vlaneseq
    %v1480 = vshrl.u32 %v1479, 7
    %v1481 = vsub.s32 0, %v1480
    %v1482 = vrot.slane %v1394, %v1481
    %v1483 = vlaneseq
    %v1484 = vshrl.u32 %v1483, 7
    %v1485 = vsub.s32 1, %v1484
    %v1486 = vrot.slane %v1394, %v1485
    %v1489 = vadd.f32 %v1470, %v1482
    %v1490 = vadd.f32 %v1471, %v1486
    %v1491 = vadd.f32 %v1472, %v1482
    %v1492 = vadd.f32 %v1473, %v1486
    %v1493 = vadd.f32 %v1474, %v1482
    %v1494 = vadd.f32 %v1475, %v1486
    %v1495 = vadd.f32 %v1476, %v1482
    %v1496 = vadd.f32 %v1477, %v1486
    %v1497 = vmul.f32 %v1489, 0.5
    %v1498 = vmul.f32 %v1490, 0.5
    %v1499 = vmul.f32 %v1491, 0.5
    %v1500 = vmul.f32 %v1492, 0.5
    %v1501 = vmul.f32 %v1493, 0.5
    %v1502 = vmul.f32 %v1494, 0.5
    %v1503 = vmul.f32 %v1495, 0.5
    %v1504 = vmul.f32 %v1496, 0.5
    %v1505 = vmul.f32 %v1489, 0.044715
    %v1506 = vmul.f32 %v1490, 0.044715
    %v1507 = vmul.f32 %v1491, 0.044715
    %v1508 = vmul.f32 %v1492, 0.044715
    %v1509 = vmul.f32 %v1493, 0.044715
    %v1510 = vmul.f32 %v1494, 0.044715
    %v1511 = vmul.f32 %v1495, 0.044715
    %v1512 = vmul.f32 %v1496, 0.044715
    %v1513 = vmul.f32 %v1505, %v1489
    %v1514 = vmul.f32 %v1506, %v1490
    %v1515 = vmul.f32 %v1507, %v1491
    %v1516 = vmul.f32 %v1508, %v1492
    %v1517 = vmul.f32 %v1509, %v1493
    %v1518 = vmul.f32 %v1510, %v1494
    %v1519 = vmul.f32 %v1511, %v1495
    %v1520 = vmul.f32 %v1512, %v1496
    %v1521 = vmul.f32 %v1513, %v1489
    %v1522 = vmul.f32 %v1514, %v1490
    %v1523 = vmul.f32 %v1515, %v1491
    %v1524 = vmul.f32 %v1516, %v1492
    %v1525 = vmul.f32 %v1517, %v1493
    %v1526 = vmul.f32 %v1518, %v1494
    %v1527 = vmul.f32 %v1519, %v1495
    %v1528 = vmul.f32 %v1520, %v1496
    %v1529 = vadd.f32 %v1489, %v1521
    %v1530 = vadd.f32 %v1490, %v1522
    %v1531 = vadd.f32 %v1491, %v1523
    %v1532 = vadd.f32 %v1492, %v1524
    %v1533 = vadd.f32 %v1493, %v1525
    %v1534 = vadd.f32 %v1494, %v1526
    %v1535 = vadd.f32 %v1495, %v1527
    %v1536 = vadd.f32 %v1496, %v1528
    %v1537 = vmul.f32 %v1529, 0.7978846
    %v1538 = vmul.f32 %v1530, 0.7978846
    %v1539 = vmul.f32 %v1531, 0.7978846
    %v1540 = vmul.f32 %v1532, 0.7978846
    %v1541 = vmul.f32 %v1533, 0.7978846
    %v1542 = vmul.f32 %v1534, 0.7978846
    %v1543 = vmul.f32 %v1535, 0.7978846
    %v1544 = vmul.f32 %v1536, 0.7978846
    %v1545 = vtanh.pop %v1537
    %v1546 = vtanh.pop %v1538
    %v1547 = vtanh.pop %v1539
    %v1548 = vtanh.pop %v1540
    %v1549 = vtanh.pop %v1541
    %v1550 = vtanh.pop %v1542
    %v1551 = vtanh.pop %v1543
    %v1552 = vtanh.pop %v1544
    %v1553 = vadd.f32 %v1545, 1.0
    %v1554 = vadd.f32 %v1546, 1.0
    %v1555 = vadd.f32 %v1547, 1.0
    %v1556 = vadd.f32 %v1548, 1.0
    %v1557 = vadd.f32 %v1549, 1.0
    %v1558 = vadd.f32 %v1550, 1.0
    %v1559 = vadd.f32 %v1551, 1.0
    %v1560 = vadd.f32 %v1552, 1.0
    %v1561 = vmul.f32 %v1497, %v1553
    %v1562 = vmul.f32 %v1498, %v1554
    %v1563 = vmul.f32 %v1499, %v1555
    %v1564 = vmul.f32 %v1500, %v1556
    %v1565 = vmul.f32 %v1501, %v1557
    %v1566 = vmul.f32 %v1502, %v1558
    %v1567 = vmul.f32 %v1503, %v1559
    %v1568 = vmul.f32 %v1504, %v1560
    %v1569 = vpack.c.bf16 %v1563, %v1561
    %v1570 = vpack.c.bf16 %v1564, %v1562
    %v1571 = vpack.c.bf16 %v1567, %v1565
    %v1572 = vpack.c.bf16 %v1568, %v1566
    %v1573 = vld [vmem:[#allocation11] sm:$0xff]
    %v1574 = vld [vmem:[#allocation11 + $0x8] sm:$0xff]
    %v1575 = vld [vmem:[#allocation11 + $0x10] sm:$0xff]
    %v1576 = vld [vmem:[#allocation11 + $0x18] sm:$0xff]
    %v1577 = vld [vmem:[#allocation11 + $0x20] sm:$0xff]
    %v1578 = vld [vmem:[#allocation11 + $0x28] sm:$0xff]
    %v1579 = vld [vmem:[#allocation11 + $0x30] sm:$0xff]
    %v1580 = vld [vmem:[#allocation11 + $0x38] sm:$0xff]
    %v1581 = vld [vmem:[#allocation11 + $0x40] sm:$0xff]
    %v1582 = vld [vmem:[#allocation11 + $0x48] sm:$0xff]
    %v1583 = vld [vmem:[#allocation11 + $0x50] sm:$0xff]
    %v1584 = vld [vmem:[#allocation11 + $0x58] sm:$0xff]
    %v1585 = vld [vmem:[#allocation11 + $0x60] sm:$0xff]
    %v1586 = vld [vmem:[#allocation11 + $0x68] sm:$0xff]
    %v1587 = vld [vmem:[#allocation11 + $0x70] sm:$0xff]
    %v1588 = vld [vmem:[#allocation11 + $0x78] sm:$0xff]
    %v1589 = vld [vmem:[#allocation11 + $0x80] sm:$0xff]
    %v1590 = vld [vmem:[#allocation11 + $0x88] sm:$0xff]
    %v1591 = vld [vmem:[#allocation11 + $0x90] sm:$0xff]
    %v1592 = vld [vmem:[#allocation11 + $0x98] sm:$0xff]
    %v1593 = vld [vmem:[#allocation11 + $0xa0] sm:$0xff]
    %v1594 = vld [vmem:[#allocation11 + $0xa8] sm:$0xff]
    %v1595 = vld [vmem:[#allocation11 + $0xb0] sm:$0xff]
    %v1596 = vld [vmem:[#allocation11 + $0xb8] sm:$0xff]
    %v1597 = vld [vmem:[#allocation11 + $0xc0] sm:$0xff]
    %v1598 = vld [vmem:[#allocation11 + $0xc8] sm:$0xff]
    %v1599 = vld [vmem:[#allocation11 + $0xd0] sm:$0xff]
    %v1600 = vld [vmem:[#allocation11 + $0xd8] sm:$0xff]
    %v1601 = vld [vmem:[#allocation11 + $0xe0] sm:$0xff]
    %v1602 = vld [vmem:[#allocation11 + $0xe8] sm:$0xff]
    %v1603 = vld [vmem:[#allocation11 + $0xf0] sm:$0xff]
    %v1604 = vld [vmem:[#allocation11 + $0xf8] sm:$0xff]
    %v1605 = vld [vmem:[%s2 + $0x13] sm:$0x3]
    %v1607 = vlaneseq
    %v1608 = vshrl.u32 %v1607, 7
    %v1609 = vsub.s32 0, %v1608
    %v1610 = vrot.slane %v1605, %v1609
    %v1611 = vlaneseq
    %v1612 = vshrl.u32 %v1611, 7
    %v1613 = vsub.s32 1, %v1612
    %v1614 = vrot.slane %v1605, %v1613
    %v1649 = vunpack.c.l.b16 %v1573
    %v1650 = vunpack.c.h.b16 %v1573
    %v1651 = vunpack.c.l.b16 %v1574
    %v1652 = vunpack.c.h.b16 %v1574
    %v1653 = vunpack.c.l.b16 %v1575
    %v1654 = vunpack.c.h.b16 %v1575
    %v1655 = vunpack.c.l.b16 %v1576
    %v1656 = vunpack.c.h.b16 %v1576
    %v1657 = vunpack.c.l.b16 %v1577
    %v1658 = vunpack.c.h.b16 %v1577
    %v1659 = vunpack.c.l.b16 %v1578
    %v1660 = vunpack.c.h.b16 %v1578
    %v1661 = vunpack.c.l.b16 %v1579
    %v1662 = vunpack.c.h.b16 %v1579
    %v1663 = vunpack.c.l.b16 %v1580
    %v1664 = vunpack.c.h.b16 %v1580
    %v1665 = vunpack.c.l.b16 %v1581
    %v1666 = vunpack.c.h.b16 %v1581
    %v1667 = vunpack.c.l.b16 %v1582
    %v1668 = vunpack.c.h.b16 %v1582
    %v1669 = vunpack.c.l.b16 %v1583
    %v1670 = vunpack.c.h.b16 %v1583
    %v1671 = vunpack.c.l.b16 %v1584
    %v1672 = vunpack.c.h.b16 %v1584
    %v1673 = vunpack.c.l.b16 %v1585
    %v1674 = vunpack.c.h.b16 %v1585
    %v1675 = vunpack.c.l.b16 %v1586
    %v1676 = vunpack.c.h.b16 %v1586
    %v1677 = vunpack.c.l.b16 %v1587
    %v1678 = vunpack.c.h.b16 %v1587
    %v1679 = vunpack.c.l.b16 %v1588
    %v1680 = vunpack.c.h.b16 %v1588
    %v1681 = vunpack.c.l.b16 %v1589
    %v1682 = vunpack.c.h.b16 %v1589
    %v1683 = vunpack.c.l.b16 %v1590
    %v1684 = vunpack.c.h.b16 %v1590
    %v1685 = vunpack.c.l.b16 %v1591
    %v1686 = vunpack.c.h.b16 %v1591
    %v1687 = vunpack.c.l.b16 %v1592
    %v1688 = vunpack.c.h.b16 %v1592
    %v1689 = vunpack.c.l.b16 %v1593
    %v1690 = vunpack.c.h.b16 %v1593
    %v1691 = vunpack.c.l.b16 %v1594
    %v1692 = vunpack.c.h.b16 %v1594
    %v1693 = vunpack.c.l.b16 %v1595
    %v1694 = vunpack.c.h.b16 %v1595
    %v1695 = vunpack.c.l.b16 %v1596
    %v1696 = vunpack.c.h.b16 %v1596
    %v1697 = vunpack.c.l.b16 %v1597
    %v1698 = vunpack.c.h.b16 %v1597
    %v1699 = vunpack.c.l.b16 %v1598
    %v1700 = vunpack.c.h.b16 %v1598
    %v1701 = vunpack.c.l.b16 %v1599
    %v1702 = vunpack.c.h.b16 %v1599
    %v1703 = vunpack.c.l.b16 %v1600
    %v1704 = vunpack.c.h.b16 %v1600
    %v1705 = vunpack.c.l.b16 %v1601
    %v1706 = vunpack.c.h.b16 %v1601
    %v1707 = vunpack.c.l.b16 %v1602
    %v1708 = vunpack.c.h.b16 %v1602
    %v1709 = vunpack.c.l.b16 %v1603
    %v1710 = vunpack.c.h.b16 %v1603
    %v1711 = vunpack.c.l.b16 %v1604
    %v1712 = vunpack.c.h.b16 %v1604
    %v1713 = vpack.c.b16 %v1651, %v1649
    %v1714 = vpack.c.b16 %v1652, %v1650
    %v1715 = vpack.c.b16 %v1655, %v1653
    %v1716 = vpack.c.b16 %v1656, %v1654
    %v1717 = vpack.c.b16 %v1659, %v1657
    %v1718 = vpack.c.b16 %v1660, %v1658
    %v1719 = vpack.c.b16 %v1663, %v1661
    %v1720 = vpack.c.b16 %v1664, %v1662
    %v1721 = vpack.c.b16 %v1667, %v1665
    %v1722 = vpack.c.b16 %v1668, %v1666
    %v1723 = vpack.c.b16 %v1671, %v1669
    %v1724 = vpack.c.b16 %v1672, %v1670
    %v1725 = vpack.c.b16 %v1675, %v1673
    %v1726 = vpack.c.b16 %v1676, %v1674
    %v1727 = vpack.c.b16 %v1679, %v1677
    %v1728 = vpack.c.b16 %v1680, %v1678
    %v1729 = vpack.c.b16 %v1683, %v1681
    %v1730 = vpack.c.b16 %v1684, %v1682
    %v1731 = vpack.c.b16 %v1687, %v1685
    %v1732 = vpack.c.b16 %v1688, %v1686
    %v1733 = vpack.c.b16 %v1691, %v1689
    %v1734 = vpack.c.b16 %v1692, %v1690
    %v1735 = vpack.c.b16 %v1695, %v1693
    %v1736 = vpack.c.b16 %v1696, %v1694
    %v1737 = vpack.c.b16 %v1699, %v1697
    %v1738 = vpack.c.b16 %v1700, %v1698
    %v1739 = vpack.c.b16 %v1703, %v1701
    %v1740 = vpack.c.b16 %v1704, %v1702
    %v1741 = vpack.c.b16 %v1707, %v1705
    %v1742 = vpack.c.b16 %v1708, %v1706
    %v1743 = vpack.c.b16 %v1711, %v1709
    %v1744 = vpack.c.b16 %v1712, %v1710
    %1777 = vmatprep.subr.bf16.mxu0 %v1714
    %1778 = vmatpush1.bf16.msra.mxu0 %v1713
    %1779 = vmatprep.subr.bf16.mxu0 %v1716
    %1780 = vmatpush1.bf16.msra.mxu0 %v1715
    %1781 = vmatprep.subr.bf16.mxu0 %v1718
    %1782 = vmatpush1.bf16.msra.mxu0 %v1717
    %1783 = vmatprep.subr.bf16.mxu0 %v1720
    %1784 = vmatpush1.bf16.msra.mxu0 %v1719
    %1785 = vmatprep.subr.bf16.mxu0 %v1722
    %1786 = vmatpush1.bf16.msra.mxu0 %v1721
    %1787 = vmatprep.subr.bf16.mxu0 %v1724
    %1788 = vmatpush1.bf16.msra.mxu0 %v1723
    %1789 = vmatprep.subr.bf16.mxu0 %v1726
    %1790 = vmatpush1.bf16.msra.mxu0 %v1725
    %1791 = vmatprep.subr.bf16.mxu0 %v1728
    %1792 = vmatpush1.bf16.msra.mxu0 %v1727
    %1793 = vmatprep.subr.bf16.mxu0 %v1730
    %1794 = vmatpush1.bf16.msra.mxu0 %v1729
    %1795 = vmatprep.subr.bf16.mxu0 %v1732
    %1796 = vmatpush1.bf16.msra.mxu0 %v1731
    %1797 = vmatprep.subr.bf16.mxu0 %v1734
    %1798 = vmatpush1.bf16.msra.mxu0 %v1733
    %1799 = vmatprep.subr.bf16.mxu0 %v1736
    %1800 = vmatpush1.bf16.msra.mxu0 %v1735
    %1801 = vmatprep.subr.bf16.mxu0 %v1738
    %1802 = vmatpush1.bf16.msra.mxu0 %v1737
    %1803 = vmatprep.subr.bf16.mxu0 %v1740
    %1804 = vmatpush1.bf16.msra.mxu0 %v1739
    %1805 = vmatprep.subr.bf16.mxu0 %v1742
    %1806 = vmatpush1.bf16.msra.mxu0 %v1741
    %1807 = vmatprep.subr.bf16.mxu0 %v1744
    %1808 = vmatpush1.bf16.msra.mxu0 %v1743
    %1809 = vmatprep.mubr.bf16.mxu0 %v1570
    %1810 = vmatmul.mubr.bf16.gmra.mrb[0].mxu0 %v1569
    %v1811 = vpop.f32.mrb[0].mxu0
    %v1812 = vadd.f32 %v1610, %v1811
    %v1813 = vpop.f32.mrb[0].mxu0
    %v1814 = vadd.f32 %v1614, %v1813
    %v1815 = vpop.f32.mrb[0].mxu0
    %v1816 = vadd.f32 %v1610, %v1815
    %v1817 = vpop.f32.mrb[0].mxu0
    %v1818 = vadd.f32 %v1614, %v1817
    %1819 = vmatprep.mubr.bf16.mxu0 %v1572
    %1820 = vmatmul.mubr.bf16.gmra.mrb[0].mxu0 %v1571
    %v1821 = vpop.f32.mrb[0].mxu0
    %v1822 = vadd.f32 %v1610, %v1821
    %v1823 = vpop.f32.mrb[0].mxu0
    %v1824 = vadd.f32 %v1614, %v1823
    %v1825 = vpop.f32.mrb[0].mxu0
    %v1826 = vadd.f32 %v1610, %v1825
    %v1827 = vpop.f32.mrb[0].mxu0
    %v1828 = vadd.f32 %v1614, %v1827
    %1829 = vdwg.mxu0
    %v1830 = vld [vmem:[%s2 + $0x15] sm:$0x3]
    %v1831 = vld [vmem:[%s2 + $0x17] sm:$0x3]
    %v1832 = vadd.f32 %v1812, %v1814
    %1833 = vadd.xlane.f32.xlu0 %v1832
    %v1834 = vpop.xlane.xlu0 %1833
    %v1835 = vadd.f32 %v1816, %v1818
    %1836 = vadd.xlane.f32.xlu0 %v1835
    %v1837 = vpop.xlane.xlu0 %1836
    %v1838 = vadd.f32 %v1822, %v1824
    %1839 = vadd.xlane.f32.xlu0 %v1838
    %v1840 = vpop.xlane.xlu0 %1839
    %v1841 = vadd.f32 %v1826, %v1828
    %1842 = vadd.xlane.f32.xlu0 %v1841
    %v1843 = vpop.xlane.xlu0 %1842
    %v1844 = vmul.f32 %v1834, 0.00390625
    %v1845 = vmul.f32 %v1837, 0.00390625
    %v1846 = vmul.f32 %v1840, 0.00390625
    %v1847 = vmul.f32 %v1843, 0.00390625
    %v1848 = vsub.f32 %v1812, %v1844
    %v1849 = vsub.f32 %v1814, %v1844
    %v1850 = vsub.f32 %v1816, %v1845
    %v1851 = vsub.f32 %v1818, %v1845
    %v1852 = vsub.f32 %v1822, %v1846
    %v1853 = vsub.f32 %v1824, %v1846
    %v1854 = vsub.f32 %v1826, %v1847
    %v1855 = vsub.f32 %v1828, %v1847
    %v1856 = vmul.f32 %v1848, %v1848
    %v1857 = vmul.f32 %v1849, %v1849
    %v1858 = vmul.f32 %v1850, %v1850
    %v1859 = vmul.f32 %v1851, %v1851
    %v1860 = vmul.f32 %v1852, %v1852
    %v1861 = vmul.f32 %v1853, %v1853
    %v1862 = vmul.f32 %v1854, %v1854
    %v1863 = vmul.f32 %v1855, %v1855
    %v1864 = vadd.f32 %v1856, %v1857
    %1865 = vadd.xlane.f32.xlu0 %v1864
    %v1866 = vpop.xlane.xlu0 %1865
    %v1867 = vadd.f32 %v1858, %v1859
    %1868 = vadd.xlane.f32.xlu0 %v1867
    %v1869 = vpop.xlane.xlu0 %1868
    %v1870 = vadd.f32 %v1860, %v1861
    %1871 = vadd.xlane.f32.xlu0 %v1870
    %v1872 = vpop.xlane.xlu0 %1871
    %v1873 = vadd.f32 %v1862, %v1863
    %1874 = vadd.xlane.f32.xlu0 %v1873
    %v1875 = vpop.xlane.xlu0 %1874
    %v1876 = vmul.f32 %v1866, 0.00390625
    %v1877 = vmul.f32 %v1869, 0.00390625
    %v1878 = vmul.f32 %v1872, 0.00390625
    %v1879 = vmul.f32 %v1875, 0.00390625
    %v1880 = vadd.f32 %v1876, 1e-05
    %v1881 = vadd.f32 %v1877, 1e-05
    %v1882 = vadd.f32 %v1878, 1e-05
    %v1883 = vadd.f32 %v1879, 1e-05
    %v1884 = vrsqrt.pop %v1880
    %v1885 = vrsqrt.pop %v1881
    %v1886 = vrsqrt.pop %v1882
    %v1887 = vrsqrt.pop %v1883
    %v1888 = vmul.f32 %v1848, %v1884
    %v1889 = vmul.f32 %v1849, %v1884
    %v1890 = vmul.f32 %v1850, %v1885
    %v1891 = vmul.f32 %v1851, %v1885
    %v1892 = vmul.f32 %v1852, %v1886
    %v1893 = vmul.f32 %v1853, %v1886
    %v1894 = vmul.f32 %v1854, %v1887
    %v1895 = vmul.f32 %v1855, %v1887
    %v1897 = vlaneseq
    %v1898 = vshrl.u32 %v1897, 7
    %v1899 = vsub.s32 0, %v1898
    %v1900 = vrot.slane %v1830, %v1899
    %v1901 = vlaneseq
    %v1902 = vshrl.u32 %v1901, 7
    %v1903 = vsub.s32 1, %v1902
    %v1904 = vrot.slane %v1830, %v1903
    %v1907 = vmul.f32 %v1888, %v1900
    %v1908 = vmul.f32 %v1889, %v1904
    %v1909 = vmul.f32 %v1890, %v1900
    %v1910 = vmul.f32 %v1891, %v1904
    %v1911 = vmul.f32 %v1892, %v1900
    %v1912 = vmul.f32 %v1893, %v1904
    %v1913 = vmul.f32 %v1894, %v1900
    %v1914 = vmul.f32 %v1895, %v1904
    %v1916 = vlaneseq
    %v1917 = vshrl.u32 %v1916, 7
    %v1918 = vsub.s32 0, %v1917
    %v1919 = vrot.slane %v1831, %v1918
    %v1920 = vlaneseq
    %v1921 = vshrl.u32 %v1920, 7
    %v1922 = vsub.s32 1, %v1921
    %v1923 = vrot.slane %v1831, %v1922
    %v1926 = vadd.f32 %v1907, %v1919
    %v1927 = vadd.f32 %v1908, %v1923
    %v1928 = vadd.f32 %v1909, %v1919
    %v1929 = vadd.f32 %v1910, %v1923
    %v1930 = vadd.f32 %v1911, %v1919
    %v1931 = vadd.f32 %v1912, %v1923
    %v1932 = vadd.f32 %v1913, %v1919
    %v1933 = vadd.f32 %v1914, %v1923
    %v1934 = vmul.f32 %v1926, 0.5
    %v1935 = vmul.f32 %v1927, 0.5
    %v1936 = vmul.f32 %v1928, 0.5
    %v1937 = vmul.f32 %v1929, 0.5
    %v1938 = vmul.f32 %v1930, 0.5
    %v1939 = vmul.f32 %v1931, 0.5
    %v1940 = vmul.f32 %v1932, 0.5
    %v1941 = vmul.f32 %v1933, 0.5
    %v1942 = vmul.f32 %v1926, 0.044715
    %v1943 = vmul.f32 %v1927, 0.044715
    %v1944 = vmul.f32 %v1928, 0.044715
    %v1945 = vmul.f32 %v1929, 0.044715
    %v1946 = vmul.f32 %v1930, 0.044715
    %v1947 = vmul.f32 %v1931, 0.044715
    %v1948 = vmul.f32 %v1932, 0.044715
    %v1949 = vmul.f32 %v1933, 0.044715
    %v1950 = vmul.f32 %v1942, %v1926
    %v1951 = vmul.f32 %v1943, %v1927
    %v1952 = vmul.f32 %v1944, %v1928
    %v1953 = vmul.f32 %v1945, %v1929
    %v1954 = vmul.f32 %v1946, %v1930
    %v1955 = vmul.f32 %v1947, %v1931
    %v1956 = vmul.f32 %v1948, %v1932
    %v1957 = vmul.f32 %v1949, %v1933
    %v1958 = vmul.f32 %v1950, %v1926
    %v1959 = vmul.f32 %v1951, %v1927
    %v1960 = vmul.f32 %v1952, %v1928
    %v1961 = vmul.f32 %v1953, %v1929
    %v1962 = vmul.f32 %v1954, %v1930
    %v1963 = vmul.f32 %v1955, %v1931
    %v1964 = vmul.f32 %v1956, %v1932
    %v1965 = vmul.f32 %v1957, %v1933
    %v1966 = vadd.f32 %v1926, %v1958
    %v1967 = vadd.f32 %v1927, %v1959
    %v1968 = vadd.f32 %v1928, %v1960
    %v1969 = vadd.f32 %v1929, %v1961
    %v1970 = vadd.f32 %v1930, %v1962
    %v1971 = vadd.f32 %v1931, %v1963
    %v1972 = vadd.f32 %v1932, %v1964
    %v1973 = vadd.f32 %v1933, %v1965
    %v1974 = vmul.f32 %v1966, 0.7978846
    %v1975 = vmul.f32 %v1967, 0.7978846
    %v1976 = vmul.f32 %v1968, 0.7978846
    %v1977 = vmul.f32 %v1969, 0.7978846
    %v1978 = vmul.f32 %v1970, 0.7978846
    %v1979 = vmul.f32 %v1971, 0.7978846
    %v1980 = vmul.f32 %v1972, 0.7978846
    %v1981 = vmul.f32 %v1973, 0.7978846
    %v1982 = vtanh.pop %v1974
    %v1983 = vtanh.pop %v1975
    %v1984 = vtanh.pop %v1976
    %v1985 = vtanh.pop %v1977
    %v1986 = vtanh.pop %v1978
    %v1987 = vtanh.pop %v1979
    %v1988 = vtanh.pop %v1980
    %v1989 = vtanh.pop %v1981
    %v1990 = vadd.f32 %v1982, 1.0
    %v1991 = vadd.f32 %v1983, 1.0
    %v1992 = vadd.f32 %v1984, 1.0
    %v1993 = vadd.f32 %v1985, 1.0
    %v1994 = vadd.f32 %v1986, 1.0
    %v1995 = vadd.f32 %v1987, 1.0
    %v1996 = vadd.f32 %v1988, 1.0
    %v1997 = vadd.f32 %v1989, 1.0
    %v1998 = vmul.f32 %v1934, %v1990
    %v1999 = vmul.f32 %v1935, %v1991
    %v2000 = vmul.f32 %v1936, %v1992
    %v2001 = vmul.f32 %v1937, %v1993
    %v2002 = vmul.f32 %v1938, %v1994
    %v2003 = vmul.f32 %v1939, %v1995
    %v2004 = vmul.f32 %v1940, %v1996
    %v2005 = vmul.f32 %v1941, %v1997
    %v2006 = vpack.c.bf16 %v2000, %v1998
    %v2007 = vpack.c.bf16 %v2001, %v1999
    %v2008 = vpack.c.bf16 %v2004, %v2002
    %v2009 = vpack.c.bf16 %v2005, %v2003
    %v2010 = vld [vmem:[#allocation13] sm:$0xf]
    %v2011 = vld [vmem:[#allocation13 + $0x4] sm:$0xf]
    %v2012 = vld [vmem:[#allocation13 + $0x8] sm:$0xf]
    %v2013 = vld [vmem:[#allocation13 + $0xc] sm:$0xf]
    %v2014 = vld [vmem:[#allocation13 + $0x10] sm:$0xf]
    %v2015 = vld [vmem:[#allocation13 + $0x14] sm:$0xf]
    %v2016 = vld [vmem:[#allocation13 + $0x18] sm:$0xf]
    %v2017 = vld [vmem:[#allocation13 + $0x1c] sm:$0xf]
    %v2018 = vld [vmem:[#allocation13 + $0x20] sm:$0xf]
    %v2019 = vld [vmem:[#allocation13 + $0x24] sm:$0xf]
    %v2020 = vld [vmem:[#allocation13 + $0x28] sm:$0xf]
    %v2021 = vld [vmem:[#allocation13 + $0x2c] sm:$0xf]
    %v2022 = vld [vmem:[#allocation13 + $0x30] sm:$0xf]
    %v2023 = vld [vmem:[#allocation13 + $0x34] sm:$0xf]
    %v2024 = vld [vmem:[#allocation13 + $0x38] sm:$0xf]
    %v2025 = vld [vmem:[#allocation13 + $0x3c] sm:$0xf]
    %v2026 = vld [vmem:[#allocation13 + $0x40] sm:$0xf]
    %v2027 = vld [vmem:[#allocation13 + $0x44] sm:$0xf]
    %v2028 = vld [vmem:[#allocation13 + $0x48] sm:$0xf]
    %v2029 = vld [vmem:[#allocation13 + $0x4c] sm:$0xf]
    %v2030 = vld [vmem:[#allocation13 + $0x50] sm:$0xf]
    %v2031 = vld [vmem:[#allocation13 + $0x54] sm:$0xf]
    %v2032 = vld [vmem:[#allocation13 + $0x58] sm:$0xf]
    %v2033 = vld [vmem:[#allocation13 + $0x5c] sm:$0xf]
    %v2034 = vld [vmem:[#allocation13 + $0x60] sm:$0xf]
    %v2035 = vld [vmem:[#allocation13 + $0x64] sm:$0xf]
    %v2036 = vld [vmem:[#allocation13 + $0x68] sm:$0xf]
    %v2037 = vld [vmem:[#allocation13 + $0x6c] sm:$0xf]
    %v2038 = vld [vmem:[#allocation13 + $0x70] sm:$0xf]
    %v2039 = vld [vmem:[#allocation13 + $0x74] sm:$0xf]
    %v2040 = vld [vmem:[#allocation13 + $0x78] sm:$0xf]
    %v2041 = vld [vmem:[#allocation13 + $0x7c] sm:$0xf]
    %v2042 = vld [vmem:[%s2 + $0x19] sm:$0x1]
    %v2044 = vlaneseq
    %v2045 = vshrl.u32 %v2044, 7
    %v2046 = vsub.s32 0, %v2045
    %v2047 = vrot.slane %v2042, %v2046
    %v2081 = vunpack.c.l.b16 %v2010
    %v2082 = vunpack.c.l.b16 %v2011
    %v2083 = vunpack.c.l.b16 %v2012
    %v2084 = vunpack.c.l.b16 %v2013
    %v2085 = vunpack.c.l.b16 %v2014
    %v2086 = vunpack.c.l.b16 %v2015
    %v2087 = vunpack.c.l.b16 %v2016
    %v2088 = vunpack.c.l.b16 %v2017
    %v2089 = vunpack.c.l.b16 %v2018
    %v2090 = vunpack.c.l.b16 %v2019
    %v2091 = vunpack.c.l.b16 %v2020
    %v2092 = vunpack.c.l.b16 %v2021
    %v2093 = vunpack.c.l.b16 %v2022
    %v2094 = vunpack.c.l.b16 %v2023
    %v2095 = vunpack.c.l.b16 %v2024
    %v2096 = vunpack.c.l.b16 %v2025
    %v2097 = vunpack.c.l.b16 %v2026
    %v2098 = vunpack.c.l.b16 %v2027
    %v2099 = vunpack.c.l.b16 %v2028
    %v2100 = vunpack.c.l.b16 %v2029
    %v2101 = vunpack.c.l.b16 %v2030
    %v2102 = vunpack.c.l.b16 %v2031
    %v2103 = vunpack.c.l.b16 %v2032
    %v2104 = vunpack.c.l.b16 %v2033
    %v2105 = vunpack.c.l.b16 %v2034
    %v2106 = vunpack.c.l.b16 %v2035
    %v2107 = vunpack.c.l.b16 %v2036
    %v2108 = vunpack.c.l.b16 %v2037
    %v2109 = vunpack.c.l.b16 %v2038
    %v2110 = vunpack.c.l.b16 %v2039
    %v2111 = vunpack.c.l.b16 %v2040
    %v2112 = vunpack.c.l.b16 %v2041
    %v2113 = vpack.c.b16 %v2082, %v2081
    %v2114 = vpack.c.b16 %v2084, %v2083
    %v2115 = vpack.c.b16 %v2086, %v2085
    %v2116 = vpack.c.b16 %v2088, %v2087
    %v2117 = vpack.c.b16 %v2090, %v2089
    %v2118 = vpack.c.b16 %v2092, %v2091
    %v2119 = vpack.c.b16 %v2094, %v2093
    %v2120 = vpack.c.b16 %v2096, %v2095
    %v2121 = vpack.c.b16 %v2098, %v2097
    %v2122 = vpack.c.b16 %v2100, %v2099
    %v2123 = vpack.c.b16 %v2102, %v2101
    %v2124 = vpack.c.b16 %v2104, %v2103
    %v2125 = vpack.c.b16 %v2106, %v2105
    %v2126 = vpack.c.b16 %v2108, %v2107
    %v2127 = vpack.c.b16 %v2110, %v2109
    %v2128 = vpack.c.b16 %v2112, %v2111
    %2145 = vmatprep.subr.bf16.mxu0 0
    %2146 = vmatpush1.bf16.msra.mxu0 %v2113
    %2147 = vmatprep.subr.bf16.mxu0 0
    %2148 = vmatpush1.bf16.msra.mxu0 %v2114
    %2149 = vmatprep.subr.bf16.mxu0 0
    %2150 = vmatpush1.bf16.msra.mxu0 %v2115
    %2151 = vmatprep.subr.bf16.mxu0 0
    %2152 = vmatpush1.bf16.msra.mxu0 %v2116
    %2153 = vmatprep.subr.bf16.mxu0 0
    %2154 = vmatpush1.bf16.msra.mxu0 %v2117
    %2155 = vmatprep.subr.bf16.mxu0 0
    %2156 = vmatpush1.bf16.msra.mxu0 %v2118
    %2157 = vmatprep.subr.bf16.mxu0 0
    %2158 = vmatpush1.bf16.msra.mxu0 %v2119
    %2159 = vmatprep.subr.bf16.mxu0 0
    %2160 = vmatpush1.bf16.msra.mxu0 %v2120
    %2161 = vmatprep.subr.bf16.mxu0 0
    %2162 = vmatpush1.bf16.msra.mxu0 %v2121
    %2163 = vmatprep.subr.bf16.mxu0 0
    %2164 = vmatpush1.bf16.msra.mxu0 %v2122
    %2165 = vmatprep.subr.bf16.mxu0 0
    %2166 = vmatpush1.bf16.msra.mxu0 %v2123
    %2167 = vmatprep.subr.bf16.mxu0 0
    %2168 = vmatpush1.bf16.msra.mxu0 %v2124
    %2169 = vmatprep.subr.bf16.mxu0 0
    %2170 = vmatpush1.bf16.msra.mxu0 %v2125
    %2171 = vmatprep.subr.bf16.mxu0 0
    %2172 = vmatpush1.bf16.msra.mxu0 %v2126
    %2173 = vmatprep.subr.bf16.mxu0 0
    %2174 = vmatpush1.bf16.msra.mxu0 %v2127
    %2175 = vmatprep.subr.bf16.mxu0 0
    %2176 = vmatpush1.bf16.msra.mxu0 %v2128
    %2177 = vmatprep.mubr.bf16.mxu0 %v2007
    %2178 = vmatmul.mubr.bf16.gmra.mrb[0].mxu0 %v2006
    %v2179 = vpop.f32.mrb[0].mxu0
    %v2180 = vadd.f32 %v2047, %v2179
    %v2181 = vpop.f32.mrb[0].mxu0
    %v2182 = vpop.f32.mrb[0].mxu0
    %v2183 = vadd.f32 %v2047, %v2182
    %v2184 = vpop.f32.mrb[0].mxu0
    %2185 = vmatprep.mubr.bf16.mxu0 %v2009
    %2186 = vmatmul.mubr.bf16.gmra.mrb[0].mxu0 %v2008
    %v2187 = vpop.f32.mrb[0].mxu0
    %v2188 = vadd.f32 %v2047, %v2187
    %v2189 = vpop.f32.mrb[0].mxu0
    %v2190 = vpop.f32.mrb[0].mxu0
    %v2191 = vadd.f32 %v2047, %v2190
    %v2192 = vpop.f32.mrb[0].mxu0
    %2193 = vdwg.mxu0
    %v2194 = vpack.c.bf16 %v2183, %v2180
    %v2195 = vpack.c.bf16 %v2191, %v2188
    %v2196 = vld [vmem:[#allocation14] sm:$0xff]
    %v2197 = vld [vmem:[#allocation14 + $0x8] sm:$0xff]
    %v2198 = vld [vmem:[#allocation14 + $0x10] sm:$0xff]
    %v2199 = vld [vmem:[#allocation14 + $0x18] sm:$0xff]
    %v2200 = vld [vmem:[#allocation14 + $0x20] sm:$0xff]
    %v2201 = vld [vmem:[#allocation14 + $0x28] sm:$0xff]
    %v2202 = vld [vmem:[#allocation14 + $0x30] sm:$0xff]
    %v2203 = vld [vmem:[#allocation14 + $0x38] sm:$0xff]
    %v2204 = vld [vmem:[#allocation14 + $0x40] sm:$0xff]
    %v2205 = vld [vmem:[#allocation14 + $0x48] sm:$0xff]
    %v2206 = vld [vmem:[#allocation14 + $0x50] sm:$0xff]
    %v2207 = vld [vmem:[#allocation14 + $0x58] sm:$0xff]
    %v2208 = vld [vmem:[#allocation14 + $0x60] sm:$0xff]
    %v2209 = vld [vmem:[#allocation14 + $0x68] sm:$0xff]
    %v2210 = vld [vmem:[#allocation14 + $0x70] sm:$0xff]
    %v2211 = vld [vmem:[#allocation14 + $0x78] sm:$0xff]
    %v2212 = vld [vmem:[#allocation14 + $0x80] sm:$0xff]
    %v2213 = vld [vmem:[#allocation14 + $0x88] sm:$0xff]
    %v2214 = vld [vmem:[#allocation14 + $0x90] sm:$0xff]
    %v2215 = vld [vmem:[#allocation14 + $0x98] sm:$0xff]
    %v2216 = vld [vmem:[#allocation14 + $0xa0] sm:$0xff]
    %v2217 = vld [vmem:[#allocation14 + $0xa8] sm:$0xff]
    %v2218 = vld [vmem:[#allocation14 + $0xb0] sm:$0xff]
    %v2219 = vld [vmem:[#allocation14 + $0xb8] sm:$0xff]
    %v2220 = vld [vmem:[#allocation14 + $0xc0] sm:$0xff]
    %v2221 = vld [vmem:[#allocation14 + $0xc8] sm:$0xff]
    %v2222 = vld [vmem:[#allocation14 + $0xd0] sm:$0xff]
    %v2223 = vld [vmem:[#allocation14 + $0xd8] sm:$0xff]
    %v2224 = vld [vmem:[#allocation14 + $0xe0] sm:$0xff]
    %v2225 = vld [vmem:[#allocation14 + $0xe8] sm:$0xff]
    %v2226 = vld [vmem:[#allocation14 + $0xf0] sm:$0xff]
    %v2227 = vld [vmem:[#allocation14 + $0xf8] sm:$0xff]
    %v2228 = vld [vmem:[%s2 + $0x1a] sm:$0xf]
    %v2230 = vlaneseq
    %v2231 = vshrl.u32 %v2230, 7
    %v2232 = vsub.s32 0, %v2231
    %v2233 = vrot.slane %v2228, %v2232
    %v2234 = vlaneseq
    %v2235 = vshrl.u32 %v2234, 7
    %v2236 = vsub.s32 1, %v2235
    %v2237 = vrot.slane %v2228, %v2236
    %v2238 = vlaneseq
    %v2239 = vshrl.u32 %v2238, 7
    %v2240 = vsub.s32 2, %v2239
    %v2241 = vrot.slane %v2228, %v2240
    %v2242 = vlaneseq
    %v2243 = vshrl.u32 %v2242, 7
    %v2244 = vsub.s32 3, %v2243
    %v2245 = vrot.slane %v2228, %v2244
    %v2282 = vunpack.c.l.b16 %v2196
    %v2283 = vunpack.c.h.b16 %v2196
    %v2284 = vunpack.c.l.b16 %v2197
    %v2285 = vunpack.c.h.b16 %v2197
    %v2286 = vunpack.c.l.b16 %v2198
    %v2287 = vunpack.c.h.b16 %v2198
    %v2288 = vunpack.c.l.b16 %v2199
    %v2289 = vunpack.c.h.b16 %v2199
    %v2290 = vunpack.c.l.b16 %v2200
    %v2291 = vunpack.c.h.b16 %v2200
    %v2292 = vunpack.c.l.b16 %v2201
    %v2293 = vunpack.c.h.b16 %v2201
    %v2294 = vunpack.c.l.b16 %v2202
    %v2295 = vunpack.c.h.b16 %v2202
    %v2296 = vunpack.c.l.b16 %v2203
    %v2297 = vunpack.c.h.b16 %v2203
    %v2298 = vunpack.c.l.b16 %v2204
    %v2299 = vunpack.c.h.b16 %v2204
    %v2300 = vunpack.c.l.b16 %v2205
    %v2301 = vunpack.c.h.b16 %v2205
    %v2302 = vunpack.c.l.b16 %v2206
    %v2303 = vunpack.c.h.b16 %v2206
    %v2304 = vunpack.c.l.b16 %v2207
    %v2305 = vunpack.c.h.b16 %v2207
    %v2306 = vunpack.c.l.b16 %v2208
    %v2307 = vunpack.c.h.b16 %v2208
    %v2308 = vunpack.c.l.b16 %v2209
    %v2309 = vunpack.c.h.b16 %v2209
    %v2310 = vunpack.c.l.b16 %v2210
    %v2311 = vunpack.c.h.b16 %v2210
    %v2312 = vunpack.c.l.b16 %v2211
    %v2313 = vunpack.c.h.b16 %v2211
    %v2314 = vunpack.c.l.b16 %v2212
    %v2315 = vunpack.c.h.b16 %v2212
    %v2316 = vunpack.c.l.b16 %v2213
    %v2317 = vunpack.c.h.b16 %v2213
    %v2318 = vunpack.c.l.b16 %v2214
    %v2319 = vunpack.c.h.b16 %v2214
    %v2320 = vunpack.c.l.b16 %v2215
    %v2321 = vunpack.c.h.b16 %v2215
    %v2322 = vunpack.c.l.b16 %v2216
    %v2323 = vunpack.c.h.b16 %v2216
    %v2324 = vunpack.c.l.b16 %v2217
    %v2325 = vunpack.c.h.b16 %v2217
    %v2326 = vunpack.c.l.b16 %v2218
    %v2327 = vunpack.c.h.b16 %v2218
    %v2328 = vunpack.c.l.b16 %v2219
    %v2329 = vunpack.c.h.b16 %v2219
    %v2330 = vunpack.c.l.b16 %v2220
    %v2331 = vunpack.c.h.b16 %v2220
    %v2332 = vunpack.c.l.b16 %v2221
    %v2333 = vunpack.c.h.b16 %v2221
    %v2334 = vunpack.c.l.b16 %v2222
    %v2335 = vunpack.c.h.b16 %v2222
    %v2336 = vunpack.c.l.b16 %v2223
    %v2337 = vunpack.c.h.b16 %v2223
    %v2338 = vunpack.c.l.b16 %v2224
    %v2339 = vunpack.c.h.b16 %v2224
    %v2340 = vunpack.c.l.b16 %v2225
    %v2341 = vunpack.c.h.b16 %v2225
    %v2342 = vunpack.c.l.b16 %v2226
    %v2343 = vunpack.c.h.b16 %v2226
    %v2344 = vunpack.c.l.b16 %v2227
    %v2345 = vunpack.c.h.b16 %v2227
    %v2346 = vpack.c.b16 %v2286, %v2282
    %v2347 = vpack.c.b16 %v2287, %v2283
    %v2348 = vpack.c.b16 %v2288, %v2284
    %v2349 = vpack.c.b16 %v2289, %v2285
    %v2350 = vpack.c.b16 %v2294, %v2290
    %v2351 = vpack.c.b16 %v2295, %v2291
    %v2352 = vpack.c.b16 %v2296, %v2292
    %v2353 = vpack.c.b16 %v2297, %v2293
    %v2354 = vpack.c.b16 %v2302, %v2298
    %v2355 = vpack.c.b16 %v2303, %v2299
    %v2356 = vpack.c.b16 %v2304, %v2300
    %v2357 = vpack.c.b16 %v2305, %v2301
    %v2358 = vpack.c.b16 %v2310, %v2306
    %v2359 = vpack.c.b16 %v2311, %v2307
    %v2360 = vpack.c.b16 %v2312, %v2308
    %v2361 = vpack.c.b16 %v2313, %v2309
    %v2362 = vpack.c.b16 %v2318, %v2314
    %v2363 = vpack.c.b16 %v2319, %v2315
    %v2364 = vpack.c.b16 %v2320, %v2316
    %v2365 = vpack.c.b16 %v2321, %v2317
    %v2366 = vpack.c.b16 %v2326, %v2322
    %v2367 = vpack.c.b16 %v2327, %v2323
    %v2368 = vpack.c.b16 %v2328, %v2324
    %v2369 = vpack.c.b16 %v2329, %v2325
    %v2370 = vpack.c.b16 %v2334, %v2330
    %v2371 = vpack.c.b16 %v2335, %v2331
    %v2372 = vpack.c.b16 %v2336, %v2332
    %v2373 = vpack.c.b16 %v2337, %v2333
    %v2374 = vpack.c.b16 %v2342, %v2338
    %v2375 = vpack.c.b16 %v2343, %v2339
    %v2376 = vpack.c.b16 %v2344, %v2340
    %v2377 = vpack.c.b16 %v2345, %v2341
    %2410 = vmatprep.subr.bf16.mxu0 %v2347
    %2411 = vmatpush1.bf16.msra.mxu0 %v2346
    %2412 = vmatprep.subr.bf16.mxu0 %v2351
    %2413 = vmatpush1.bf16.msra.mxu0 %v2350
    %2414 = vmatprep.subr.bf16.mxu0 %v2355
    %2415 = vmatpush1.bf16.msra.mxu0 %v2354
    %2416 = vmatprep.subr.bf16.mxu0 %v2359
    %2417 = vmatpush1.bf16.msra.mxu0 %v2358
    %2418 = vmatprep.subr.bf16.mxu0 %v2363
    %2419 = vmatpush1.bf16.msra.mxu0 %v2362
    %2420 = vmatprep.subr.bf16.mxu0 %v2367
    %2421 = vmatpush1.bf16.msra.mxu0 %v2366
    %2422 = vmatprep.subr.bf16.mxu0 %v2371
    %2423 = vmatpush1.bf16.msra.mxu0 %v2370
    %2424 = vmatprep.subr.bf16.mxu0 %v2375
    %2425 = vmatpush1.bf16.msra.mxu0 %v2374
    %2426 = vmatprep.subr.bf16.mxu0 0
    %2427 = vmatpush1.bf16.msra.mxu0 0
    %2428 = vmatprep.subr.bf16.mxu0 0
    %2429 = vmatpush1.bf16.msra.mxu0 0
    %2430 = vmatprep.subr.bf16.mxu0 0
    %2431 = vmatpush1.bf16.msra.mxu0 0
    %2432 = vmatprep.subr.bf16.mxu0 0
    %2433 = vmatpush1.bf16.msra.mxu0 0
    %2434 = vmatprep.subr.bf16.mxu0 0
    %2435 = vmatpush1.bf16.msra.mxu0 0
    %2436 = vmatprep.subr.bf16.mxu0 0
    %2437 = vmatpush1.bf16.msra.mxu0 0
    %2438 = vmatprep.subr.bf16.mxu0 0
    %2439 = vmatpush1.bf16.msra.mxu0 0
    %2440 = vmatprep.subr.bf16.mxu0 0
    %2441 = vmatpush1.bf16.msra.mxu0 0
    %2442 = vmatprep.mubr.bf16.mxu0 0
    %2443 = vmatmul.mubr.bf16.gmra.mrb[0].mxu0 %v2194
    %v2444 = vpop.f32.mrb[0].mxu0
    %v2445 = vadd.f32 %v2233, %v2444
    %v2446 = vpop.f32.mrb[0].mxu0
    %v2447 = vadd.f32 %v2237, %v2446
    %v2448 = vpop.f32.mrb[0].mxu0
    %v2449 = vadd.f32 %v2233, %v2448
    %v2450 = vpop.f32.mrb[0].mxu0
    %v2451 = vadd.f32 %v2237, %v2450
    %2452 = vmatprep.mubr.bf16.mxu0 0
    %2453 = vmatmul.mubr.bf16.gmra.mrb[0].mxu0 %v2195
    %v2454 = vpop.f32.mrb[0].mxu0
    %v2455 = vadd.f32 %v2233, %v2454
    %v2456 = vpop.f32.mrb[0].mxu0
    %v2457 = vadd.f32 %v2237, %v2456
    %v2458 = vpop.f32.mrb[0].mxu0
    %v2459 = vadd.f32 %v2233, %v2458
    %v2460 = vpop.f32.mrb[0].mxu0
    %v2461 = vadd.f32 %v2237, %v2460
    %2462 = vdwg.mxu0
    %2463 = vmatprep.subr.bf16.mxu0 %v2349
    %2464 = vmatpush1.bf16.msra.mxu0 %v2348
    %2465 = vmatprep.subr.bf16.mxu0 %v2353
    %2466 = vmatpush1.bf16.msra.mxu0 %v2352
    %2467 = vmatprep.subr.bf16.mxu0 %v2357
    %2468 = vmatpush1.bf16.msra.mxu0 %v2356
    %2469 = vmatprep.subr.bf16.mxu0 %v2361
    %2470 = vmatpush1.bf16.msra.mxu0 %v2360
    %2471 = vmatprep.subr.bf16.mxu0 %v2365
    %2472 = vmatpush1.bf16.msra.mxu0 %v2364
    %2473 = vmatprep.subr.bf16.mxu0 %v2369
    %2474 = vmatpush1.bf16.msra.mxu0 %v2368
    %2475 = vmatprep.subr.bf16.mxu0 %v2373
    %2476 = vmatpush1.bf16.msra.mxu0 %v2372
    %2477 = vmatprep.subr.bf16.mxu0 %v2377
    %2478 = vmatpush1.bf16.msra.mxu0 %v2376
    %2479 = vmatprep.subr.bf16.mxu0 0
    %2480 = vmatpush1.bf16.msra.mxu0 0
    %2481 = vmatprep.subr.bf16.mxu0 0
    %2482 = vmatpush1.bf16.msra.mxu0 0
    %2483 = vmatprep.subr.bf16.mxu0 0
    %2484 = vmatpush1.bf16.msra.mxu0 0
    %2485 = vmatprep.subr.bf16.mxu0 0
    %2486 = vmatpush1.bf16.msra.mxu0 0
    %2487 = vmatprep.subr.bf16.mxu0 0
    %2488 = vmatpush1.bf16.msra.mxu0 0
    %2489 = vmatprep.subr.bf16.mxu0 0
    %2490 = vmatpush1.bf16.msra.mxu0 0
    %2491 = vmatprep.subr.bf16.mxu0 0
    %2492 = vmatpush1.bf16.msra.mxu0 0
    %2493 = vmatprep.subr.bf16.mxu0 0
    %2494 = vmatpush1.bf16.msra.mxu0 0
    %2495 = vmatprep.mubr.bf16.mxu0 0
    %2496 = vmatmul.mubr.bf16.gmra.mrb[0].mxu0 %v2194
    %v2497 = vpop.f32.mrb[0].mxu0
    %v2498 = vadd.f32 %v2241, %v2497
    %v2499 = vpop.f32.mrb[0].mxu0
    %v2500 = vadd.f32 %v2245, %v2499
    %v2501 = vpop.f32.mrb[0].mxu0
    %v2502 = vadd.f32 %v2241, %v2501
    %v2503 = vpop.f32.mrb[0].mxu0
    %v2504 = vadd.f32 %v2245, %v2503
    %2505 = vmatprep.mubr.bf16.mxu0 0
    %2506 = vmatmul.mubr.bf16.gmra.mrb[0].mxu0 %v2195
    %v2507 = vpop.f32.mrb[0].mxu0
    %v2508 = vadd.f32 %v2241, %v2507
    %v2509 = vpop.f32.mrb[0].mxu0
    %v2510 = vadd.f32 %v2245, %v2509
    %v2511 = vpop.f32.mrb[0].mxu0
    %v2512 = vadd.f32 %v2241, %v2511
    %v2513 = vpop.f32.mrb[0].mxu0
    %v2514 = vadd.f32 %v2245, %v2513
    %2515 = vdwg.mxu0
    %2516 = vst [vmem:[#allocation16] sm:$0xff] %v2445
    %2517 = vst [vmem:[#allocation16 + $0x8] sm:$0xff] %v2447
    %2518 = vst [vmem:[#allocation16 + $0x10] sm:$0xff] %v2498
    %2519 = vst [vmem:[#allocation16 + $0x18] sm:$0xff] %v2500
    %2520 = vst [vmem:[#allocation16 + $0x20] sm:$0xff] %v2449
    %2521 = vst [vmem:[#allocation16 + $0x28] sm:$0xff] %v2451
    %2522 = vst [vmem:[#allocation16 + $0x30] sm:$0xff] %v2502
    %2523 = vst [vmem:[#allocation16 + $0x38] sm:$0xff] %v2504
    %2524 = vst [vmem:[#allocation16 + $0x40] sm:$0xff] %v2455
    %2525 = vst [vmem:[#allocation16 + $0x48] sm:$0xff] %v2457
    %2526 = vst [vmem:[#allocation16 + $0x50] sm:$0xff] %v2508
    %2527 = vst [vmem:[#allocation16 + $0x58] sm:$0xff] %v2510
    %2528 = vst [vmem:[#allocation16 + $0x60] sm:$0xff] %v2459
    %2529 = vst [vmem:[#allocation16 + $0x68] sm:$0xff] %v2461
    %2530 = vst [vmem:[#allocation16 + $0x70] sm:$0xff] %v2512
    %2531 = vst [vmem:[#allocation16 + $0x78] sm:$0xff] %v2514
    // Predicated region
    $region74: #{tpu_custom_call.1} parent=1 // pred_check
      _
    $region75: #{tpu_custom_call.1} parent=1 // pred_check_branch
      %2533 = sbr.rel (0) target = $region77
    $region76: #{tpu_custom_call.1} parent=1 // pred_region
      %s2535 = ssub.s32 2048, 2048
      %2536 = vsyncadd [#allocation4], %s2535
      %s2537 = sshll.u32 [#allocation16], 4
      %s2538 = int_to_ptr.vmem [resolvable:$true] %s2537
      %2543 = dma.vmem_to_hbm [thread:$0]  %s2538, 2048, %s10, [#allocation4], 512, 512, 32
    $region77: #{tpu_custom_call.1} parent=1 // pred_fallthru
      _
    // Predicated region
    $region78: #{tpu_custom_call.1} parent=1 // pred_check
      _
    $region79: #{tpu_custom_call.1} parent=1 // pred_check_branch
      %2545 = sbr.rel (0) target = $region81
    $region80: #{tpu_custom_call.1} parent=1 // pred_region
      %2546 = dma.done [#allocation4], 2048
    $region81: #{tpu_custom_call.1} parent=1 // pred_fallthru
      _
    %2547 = vsyncpa [#allocation3], 1
    %2548 = vsyncpa [#allocation6], 1
    %2549 = vsyncpa [#allocation9], 1
    %2550 = vsyncpa [#allocation12], 1
    %2551 = vsyncpa [#allocation15], 1
    %2552 = vsyncpa [#allocation4], 1

</llo_original>
